<compile_context>
chip_gen: v7x
topology: tpu7x:2x2x1
jax: 0.10.0
libtpu: 0.0.40
codegen_flags: <defaults>
</compile_context>

<pallas_src>
import functools
import itertools
import numpy as np
import jax
import jax.numpy as jnp
from jax import lax
from jax.experimental import pallas as pl
from jax.experimental.pallas import tpu as pltpu


# --------------------------------------------------------------------------------------
# Kernel
# --------------------------------------------------------------------------------------
def matcher_cost_kernel(logits_ref, masks_ref, tgt_ref, cls_ref,
                        class_sim_ref, mask_sim_ref, cost_ref,
                        cls_sim_sc, acc_sc, trow_sc,
                        *, masking_void_pixel, hw_valid, tile_hw, pad_present):
    h = pl.program_id(1)
    nh = pl.num_programs(1)
    T = trow_sc.shape[-1]

    # ---- once per batch element: zero accumulators + class similarity -----------------
    @pl.when(h == 0)
    def _init():
        acc_sc[...] = jnp.zeros_like(acc_sc)
        trow_sc[...] = jnp.zeros_like(trow_sc)

        logits = logits_ref[0]                        # [Q, C] f32
        cls = cls_ref[0]                              # [1, T] int32 (organ - 1)
        nc = logits.shape[-1]
        nt = cls.shape[-1]

        lmax = jnp.max(logits, axis=-1, keepdims=True)
        le = jnp.exp(logits - lmax)
        inv = pl.reciprocal(jnp.sum(le, axis=-1, keepdims=True), approx=True)
        probs = le * inv                              # [Q, C] softmax incl. void

        # One-hot gather with the void column forced to zero (no non-128 lane slice).
        col = lax.broadcasted_iota(jnp.int32, (nc, nt), 0)        # [C, T]
        onehot = jnp.where((col == cls) & (col < nc - 1), 1.0, 0.0)
        cls_sim_sc[...] = jnp.dot(probs, onehot,
                                  preferred_element_type=jnp.float32)   # [Q, T]

    # ---- every HW tile: per-pixel softmax over queries + accumulation -----------------
    m = masks_ref[0].astype(jnp.float32)              # [Q, thw] native dtype -> f32 math
    t = tgt_ref[0]                                    # [T, thw] native dtype (binary)

    mmax = jnp.max(m, axis=0, keepdims=True)          # softmax over the query axis
    me = jnp.exp(m - mmax)                            # [Q, thw]
    scale = pl.reciprocal(jnp.sum(me, axis=0, keepdims=True), approx=True)   # [1, thw]
    if masking_void_pixel:
        # Fuse the non-void mask into the softmax scale (one [1, thw] where, no [Q, thw] pass).
        scale = jnp.where(jnp.max(t, axis=0, keepdims=True) > 0, scale, 0.0)
    if pad_present:
        # Mask the padded tail pixels (exact for both masking_void_pixel settings).
        pix = h * tile_hw + lax.broadcasted_iota(jnp.int32, (1, tile_hw), 1)
        scale = jnp.where(pix < hw_valid, scale, 0.0)

    soft16 = (me * scale).astype(jnp.bfloat16)        # materialized once, directly bf16

    t16 = t.astype(jnp.bfloat16)                      # binary -> bf16 exact
    ones_row = jnp.ones((1, tile_hw), dtype=jnp.bfloat16)
    t_aug = jnp.concatenate([t16, ones_row], axis=0)  # [T+1, thw]

    # Contract the last (lane) dims of both operands -> no in-kernel [T, thw] transpose.
    contract_last = (((1,), (1,)), ((), ()))
    # One MXU dot yields intersection ([:, :T]) AND soft row-sum ([:, T]).
    acc_sc[...] += lax.dot_general(soft16, t_aug, contract_last,
                                   preferred_element_type=jnp.float32)        # [Q, T+1]
    trow_sc[...] += lax.dot_general(ones_row, t16, contract_last,
                                    preferred_element_type=jnp.float32)       # [1, T]

    # ---- after the last HW tile: normalize and emit ------------------------------------
    @pl.when(h == nh - 1)
    def _finalize():
        acc = acc_sc[...]
        inter = acc[:, :T]                            # [Q, T]
        srow = acc[:, T:T + 1]                        # [Q, 1]
        denom = (srow + trow_sc[...]) * 0.5 + 1e-5    # [Q,1]+[1,T] -> [Q,T]
        mask_sim = inter * pl.reciprocal(denom, approx=True)
        cls_sim = cls_sim_sc[...]
        class_sim_ref[0] = cls_sim
        mask_sim_ref[0] = mask_sim
        cost_ref[0] = -mask_sim * cls_sim


# --------------------------------------------------------------------------------------
# Wrapper
# --------------------------------------------------------------------------------------
def _choose_tiling(hw, target):
    """Returns (tile_hw, hw_padded). tile is a multiple of 128 or the full extent; never the
    silent full-HW fallback when HW is huge - pad instead (padded pixels masked in-kernel)."""
    target = max(128, (target // 128) * 128)
    if hw <= target:
        return hw, hw                              # single full-extent tile (always legal)
    best = None
    for d in range(128, target + 1, 128):
        if hw % d == 0:
            best = d
    if best is not None:
        return best, hw
    tile = target
    hw_pad = ((hw + tile - 1) // tile) * tile
    return tile, hw_pad


def _vmem_limit_bytes(Q, C, T, tile_hw, mask_itemsize, tgt_itemsize):
    """Footprint-derived scoped-VMEM request with headroom, capped for v7x's 64 MiB/TC."""
    blocks = 2 * (Q * tile_hw * mask_itemsize + T * tile_hw * tgt_itemsize
                  + Q * C * 4 + T * 4)              # double-buffered input blocks
    outs = 2 * 3 * Q * T * 4                        # resident output blocks
    scratch = (Q * T + Q * (T + 1) + T) * 4         # accumulators
    temps = Q * tile_hw * (4 + 4 + 2) + (T + 1) * tile_hw * 2   # exp/soft/bf16 temporaries
    est = blocks + outs + scratch + temps
    return int(min(max(2 * est, 32 * 1024 * 1024), 48 * 1024 * 1024))


def matcher_costs(pred_logits, pred_masks_flat, tgt_masks_flat, cls_idx,
                  tile_hw=None, tile_hw_target=8192, masking_void_pixel=True):
    """Returns (class_sim, mask_sim, cost), each [B, Q, T] float32.

    tile_hw_target=8192 amortizes the ~0.35us per-grid-step overhead while keeping the
    double-buffered blocks + softmax temps well under v7x's 64 MiB VMEM (raiseable to
    16384 on v5e/v6e's 128 MiB)."""
    B, Q, C = pred_logits.shape
    T = tgt_masks_flat.shape[1]
    HW = pred_masks_flat.shape[-1]

    if tile_hw is None:
        tile_hw, HW_pad = _choose_tiling(HW, tile_hw_target)
    else:
        HW_pad = ((HW + tile_hw - 1) // tile_hw) * tile_hw
    if HW_pad != HW:
        pad = HW_pad - HW
        pred_masks_flat = jnp.pad(pred_masks_flat, ((0, 0), (0, 0), (0, pad)))
        tgt_masks_flat = jnp.pad(tgt_masks_flat, ((0, 0), (0, 0), (0, pad)))
    nh = HW_pad // tile_hw

    kernel = functools.partial(matcher_cost_kernel,
                               masking_void_pixel=masking_void_pixel,
                               hw_valid=HW, tile_hw=tile_hw,
                               pad_present=(HW_pad != HW))
    out_shapes = (
        jax.ShapeDtypeStruct((B, Q, T), jnp.float32),  # class_sim
        jax.ShapeDtypeStruct((B, Q, T), jnp.float32),  # mask_sim
        jax.ShapeDtypeStruct((B, Q, T), jnp.float32),  # cost
    )
    grid_spec = pltpu.PrefetchScalarGridSpec(
        num_scalar_prefetch=0,
        grid=(B, nh),
        in_specs=[
            pl.BlockSpec((1, Q, C), lambda b, h: (b, 0, 0)),
            pl.BlockSpec((1, Q, tile_hw), lambda b, h: (b, 0, h)),
            pl.BlockSpec((1, T, tile_hw), lambda b, h: (b, 0, h)),
            pl.BlockSpec((1, 1, T), lambda b, h: (b, 0, 0)),
        ],
        out_specs=(
            pl.BlockSpec((1, Q, T), lambda b, h: (b, 0, 0)),
            pl.BlockSpec((1, Q, T), lambda b, h: (b, 0, 0)),
            pl.BlockSpec((1, Q, T), lambda b, h: (b, 0, 0)),
        ),
        scratch_shapes=[
            pltpu.VMEM((Q, T), jnp.float32),       # class_sim (once per batch)
            pltpu.VMEM((Q, T + 1), jnp.float32),   # intersection + soft row-sum accumulator
            pltpu.VMEM((1, T), jnp.float32),       # target row-sum accumulator
        ])
    vmem_limit = _vmem_limit_bytes(Q, C, T, tile_hw,
                                   jnp.dtype(pred_masks_flat.dtype).itemsize,
                                   jnp.dtype(tgt_masks_flat.dtype).itemsize)
    return pl.pallas_call(
        kernel,
        out_shape=out_shapes,
        grid_spec=grid_spec,
        compiler_params=pltpu.CompilerParams(
            dimension_semantics=("parallel", "arbitrary"),
            vmem_limit_bytes=vmem_limit),
    )(pred_logits.astype(jnp.float32),
      pred_masks_flat,                 # streamed in native dtype (no wrapper cast pass)
      tgt_masks_flat,                  # streamed in native dtype
      cls_idx.astype(jnp.int32))


# --------------------------------------------------------------------------------------
# Host-side assignment (sequential algorithm, no Pallas equivalent)
# --------------------------------------------------------------------------------------
def _hungarian_min(cost):
    """Kuhn-Munkres with potentials (O(n^2*m)); cost is [n, m] with n <= m.
    Returns, for each row, its assigned column."""
    cost = np.asarray(cost, dtype=np.float64)
    n, m = cost.shape
    INF = np.inf
    u = np.zeros(n + 1)
    v = np.zeros(m + 1)
    p = np.zeros(m + 1, dtype=np.int64)
    way = np.zeros(m + 1, dtype=np.int64)
    for i in range(1, n + 1):
        p[0] = i
        j0 = 0
        minv = np.full(m + 1, INF)
        used = np.zeros(m + 1, dtype=bool)
        while True:
            used[j0] = True
            i0 = p[j0]
            delta = INF
            j1 = 0
            for j in range(1, m + 1):
                if not used[j]:
                    cur = cost[i0 - 1, j - 1] - u[i0] - v[j]
                    if cur < minv[j]:
                        minv[j] = cur
                        way[j] = j0
                    if minv[j] < delta:
                        delta = minv[j]
                        j1 = j
            for j in range(m + 1):
                if used[j]:
                    u[p[j]] += delta
                    v[j] -= delta
                else:
                    minv[j] -= delta
            j0 = j1
            if p[j0] == 0:
                break
        while j0 != 0:
            j1 = way[j0]
            p[j0] = p[j1]
            j0 = j1
    row_to_col = np.zeros(n, dtype=np.int64)
    for j in range(1, m + 1):
        if p[j] != 0:
            row_to_col[p[j] - 1] = j - 1
    return row_to_col


def _linear_sum_assignment(C):
    """Minimal-cost assignment over min(nq, nt) pairs; pairs sorted by row index."""
    C = np.asarray(C, dtype=np.float64)
    nq, nt = C.shape
    if nq >= nt:
        rows = _hungarian_min(C.T)                 # for each target -> query row
        cols = np.arange(nt, dtype=np.int64)
    else:
        rows = np.arange(nq, dtype=np.int64)
        cols = _hungarian_min(C)
    order = np.argsort(rows, kind="stable")
    return rows[order], cols[order]


class HungarianMatcher:
    """Pallas-backed HungarianMatcher: cost matrices on TPU, assignment on host."""

    def __init__(self, masking_void_pixel=True):
        self.masking_void_pixel = masking_void_pixel

    def forward(self, outputs, targets, cls_list):
        pred_logits = outputs['pred_logits']                      # [B, Q, C]
        pred_masks = outputs['pred_masks']                        # [B, Q, H, W]
        B, Q = pred_logits.shape[:2]
        pred_masks_flat = pred_masks.reshape(B, Q, -1)
        tgt_flat = targets.reshape(B, targets.shape[1], -1).astype(pred_masks_flat.dtype)
        cls_idx = (jnp.asarray(cls_list, dtype=jnp.int32) - 1)[:, None, :]   # [B,1,T]

        class_sim, mask_sim, cost = matcher_costs(
            pred_logits, pred_masks_flat, tgt_flat, cls_idx,
            masking_void_pixel=self.masking_void_pixel)
        class_sim = np.asarray(jax.block_until_ready(class_sim))
        mask_sim = np.asarray(jax.block_until_ready(mask_sim))
        cost = np.asarray(jax.block_until_ready(cost))

        indices, matched_dice, matched_cls_prob = [], [], []
        for b in range(B):
            row, col = _linear_sum_assignment(cost[b])
            indices.append((row, col))
            matched_dice.append(mask_sim[b][row, col])
            matched_cls_prob.append(class_sim[b][row, col])
        return indices, matched_dice, matched_cls_prob


# --------------------------------------------------------------------------------------
# Reference + self-test
# --------------------------------------------------------------------------------------
def _ref_per_batch(logits, masks, tgt, cls_idx, masking_void_pixel=True):
    """Pure numpy reference of the PyTorch cost computation."""
    e = np.exp(logits - logits.max(-1, keepdims=True))
    probs = e / e.sum(-1, keepdims=True)
    class_sim = probs[:, :-1][:, cls_idx]
    em = np.exp(masks - masks.max(0, keepdims=True))
    soft = em / em.sum(0, keepdims=True)
    if masking_void_pixel:
        nv = (tgt.sum(0, keepdims=True) > 0).astype(np.float32)
        soft = soft * nv
    inter = soft @ tgt.T
    denom = (soft.sum(-1)[:, None] + tgt.sum(-1)[None, :]) / 2.0
    mask_sim = inter / (denom + 1e-5)
    return class_sim, mask_sim


def _brute_force_assignment(C):
    nq, nt = C.shape
    best_perm, best_cost = None, np.inf
    for perm in itertools.permutations(range(nq), nt):
        c = sum(C[perm[j], j] for j in range(nt))
        if c < best_cost:
            best_cost, best_perm = c, perm
    pairs = sorted(zip(best_perm, range(nt)))
    return (np.array([p[0] for p in pairs], dtype=np.int64),
            np.array([p[1] for p in pairs], dtype=np.int64))


if __name__ == "__main__":
    B, Q, C, T, H, W = 2, 8, 5, 3, 32, 32   # C includes void; organ labels are 1..C-1
    key = jax.random.PRNGKey(0)
    k1, k2, k3, k4, k5, k6 = jax.random.split(key, 6)

    pred_logits = jax.random.normal(k1, (B, Q, C), dtype=jnp.float32)
    pred_masks = jax.random.normal(k2, (B, Q, H, W), dtype=jnp.float32)
    tgt_masks = (jax.random.uniform(k3, (B, T, H, W)) > 0.6).astype(jnp.float32)
    cls_list = jax.random.randint(k4, (B, T), minval=1, maxval=C)   # labels in [1, C-1]

    logits_np = np.asarray(pred_logits)
    masks_np = np.asarray(pred_masks).reshape(B, Q, -1)
    tgt_np = np.asarray(tgt_masks).reshape(B, T, -1)
    cls_np = np.asarray(cls_list) - 1
    cls_idx = (jnp.asarray(cls_list, dtype=jnp.int32) - 1)[:, None, :]

    # Full forward pass (default tiling path: HW=1024 -> single full-extent tile).
    matcher = HungarianMatcher(masking_void_pixel=True)
    indices, matched_dice, matched_cls_prob = matcher.forward(
        {'pred_logits': pred_logits, 'pred_masks': pred_masks}, tgt_masks, cls_list)

    # Direct kernel check with a forced small tile so the multi-tile accumulation path
    # (grid = (B, 4)) is exercised.
    cs, ms, cost = matcher_costs(pred_logits, jnp.asarray(masks_np), jnp.asarray(tgt_np),
                                 cls_idx, tile_hw=256, masking_void_pixel=True)
    cs = np.asarray(jax.block_until_ready(cs))
    ms = np.asarray(jax.block_until_ready(ms))
    cost = np.asarray(jax.block_until_ready(cost))

    for b in range(B):
        cs_ref, ms_ref = _ref_per_batch(logits_np[b], masks_np[b], tgt_np[b], cls_np[b], True)
        assert np.allclose(cs[b], cs_ref, rtol=1e-2, atol=1e-3)
        assert np.allclose(ms[b], ms_ref, rtol=1e-2, atol=1e-3)
        assert np.allclose(cost[b], -ms_ref * cs_ref, rtol=1e-2, atol=1e-3)
        assert len(indices[b][0]) == min(Q, T)
        # Hungarian (host) must reach the brute-force optimal total cost.
        r_h, c_h = _linear_sum_assignment(cost[b])
        r_bf, c_bf = _brute_force_assignment(cost[b])
        assert np.isclose(cost[b][r_h, c_h].sum(), cost[b][r_bf, c_bf].sum(), atol=1e-6)

    # Padded / ragged-HW path: HW not a multiple of 128 -> wrapper pads, kernel masks the
    # tail pixels (tested with masking_void_pixel=False, the case that needs the mask).
    HW2 = 1056
    masks2 = jax.random.normal(k5, (B, Q, HW2), dtype=jnp.float32)
    tgt2 = (jax.random.uniform(k6, (B, T, HW2)) > 0.5).astype(jnp.float32)
    cs2, ms2, cost2 = matcher_costs(pred_logits, masks2, tgt2, cls_idx,
                                    tile_hw=128, masking_void_pixel=False)
    cs2 = np.asarray(jax.block_until_ready(cs2))
    ms2 = np.asarray(jax.block_until_ready(ms2))
    cost2 = np.asarray(jax.block_until_ready(cost2))
    masks2_np, tgt2_np = np.asarray(masks2), np.asarray(tgt2)
    for b in range(B):
        cs_ref, ms_ref = _ref_per_batch(logits_np[b], masks2_np[b], tgt2_np[b], cls_np[b], False)
        assert np.allclose(cs2[b], cs_ref, rtol=1e-2, atol=1e-3)
        assert np.allclose(ms2[b], ms_ref, rtol=1e-2, atol=1e-3)
        assert np.allclose(cost2[b], -ms_ref * cs_ref, rtol=1e-2, atol=1e-3)

    print("KERNEL_OK")
</pallas_src>

<mosaic_0001>
module attributes {stable_mosaic.version = 11 : i64} {
  func.func @matcher_cost_kernel(%arg0: i32, %arg1: i32, %arg2: memref<1x8x5xf32, #tpu.memory_space<vmem>>, %arg3: memref<1x8x1024xf32, #tpu.memory_space<vmem>>, %arg4: memref<1x3x1024xf32, #tpu.memory_space<vmem>>, %arg5: memref<1x1x3xi32, #tpu.memory_space<vmem>>, %arg6: memref<1x8x3xf32, #tpu.memory_space<vmem>>, %arg7: memref<1x8x3xf32, #tpu.memory_space<vmem>>, %arg8: memref<1x8x3xf32, #tpu.memory_space<vmem>>, %arg9: memref<8x3xf32, #tpu.memory_space<vmem>>, %arg10: memref<8x4xf32, #tpu.memory_space<vmem>>, %arg11: memref<1x3xf32, #tpu.memory_space<vmem>>) attributes {dimension_semantics = [#tpu.dimension_semantics<parallel>, #tpu.dimension_semantics<arbitrary>], iteration_bounds = array<i64: 2, 1>, scalar_prefetch = 0 : i64, scratch_operands = 3 : i64, tpu.core_type = #tpu.core_type<tc>, window_params = [{transform_indices = @transform_0, window_bounds = array<i64: 1, 8, 5>}, {transform_indices = @transform_1, window_bounds = array<i64: 1, 8, 1024>}, {transform_indices = @transform_2, window_bounds = array<i64: 1, 3, 1024>}, {transform_indices = @transform_3, window_bounds = array<i64: 1, 1, 3>}, {transform_indices = @transform_4, window_bounds = array<i64: 1, 8, 3>}, {transform_indices = @transform_5, window_bounds = array<i64: 1, 8, 3>}, {transform_indices = @transform_6, window_bounds = array<i64: 1, 8, 3>}]} {
    %c0_i32 = arith.constant 0 : i32
    %0 = arith.cmpi eq, %arg1, %c0_i32 : i32
    %1 = arith.extui %0 : i1 to i32
    %c0_i32_0 = arith.constant 0 : i32
    %2 = arith.cmpi ne, %1, %c0_i32_0 : i32
    scf.if %2 {
      %cst_23 = arith.constant 0.000000e+00 : f32
      %38 = vector.broadcast %cst_23 : f32 to vector<8x4xf32>
      %c0_24 = arith.constant 0 : index
      %c0_25 = arith.constant 0 : index
      %39 = vector.load %arg10[%c0_24, %c0_25] : memref<8x4xf32, #tpu.memory_space<vmem>>, vector<8x4xf32>
      tpu.vector_store %arg10[%c0_24, %c0_25], %38 {strides = array<i32>} : memref<8x4xf32, #tpu.memory_space<vmem>>, vector<8x4xf32>,
      %cst_26 = arith.constant 0.000000e+00 : f32
      %40 = vector.broadcast %cst_26 : f32 to vector<1x3xf32>
      %c0_27 = arith.constant 0 : index
      %c0_28 = arith.constant 0 : index
      %41 = vector.load %arg11[%c0_27, %c0_28] : memref<1x3xf32, #tpu.memory_space<vmem>>, vector<1x3xf32>
      tpu.vector_store %arg11[%c0_27, %c0_28], %40 {strides = array<i32>} : memref<1x3xf32, #tpu.memory_space<vmem>>, vector<1x3xf32>,
      %c0_29 = arith.constant 0 : index
      %c0_30 = arith.constant 0 : index
      %c0_31 = arith.constant 0 : index
      %42 = vector.load %arg2[%c0_29, %c0_30, %c0_31] : memref<1x8x5xf32, #tpu.memory_space<vmem>>, vector<1x8x5xf32>
      %43 = vector.shape_cast %42 : vector<1x8x5xf32> to vector<8x5xf32>
      %c0_32 = arith.constant 0 : index
      %c0_33 = arith.constant 0 : index
      %c0_34 = arith.constant 0 : index
      %44 = vector.load %arg5[%c0_32, %c0_33, %c0_34] : memref<1x1x3xi32, #tpu.memory_space<vmem>>, vector<1x1x3xi32>
      %45 = vector.shape_cast %44 : vector<1x1x3xi32> to vector<1x3xi32>
      %cst_35 = arith.constant dense<0xFF800000> : vector<8xf32>
      %46 = vector.multi_reduction <maximumf>, %43, %cst_35 [1] : vector<8x5xf32> to vector<8xf32>
      %47 = vector.shape_cast %46 : vector<8xf32> to vector<8x1xf32>
      %48 = vector.broadcast %47 : vector<8x1xf32> to vector<8x5xf32>
      %49 = arith.subf %43, %48 : vector<8x5xf32>
      %50 = math.exp %49 : vector<8x5xf32>
      %cst_36 = arith.constant dense<0.000000e+00> : vector<8xf32>
      %51 = vector.multi_reduction <add>, %50, %cst_36 [1] : vector<8x5xf32> to vector<8xf32>
      %52 = vector.shape_cast %51 : vector<8xf32> to vector<8x1xf32>
      %53 = tpu.reciprocal %52 {approx = true} : vector<8x1xf32> -> vector<8x1xf32>
      %54 = vector.broadcast %53 : vector<8x1xf32> to vector<8x5xf32>
      %55 = arith.mulf %50, %54 : vector<8x5xf32>
      %56 = tpu.iota {dimensions = array<i32: 0>} : vector<5x3xi32>
      %57 = vector.broadcast %45 : vector<1x3xi32> to vector<5x3xi32>
      %58 = arith.cmpi eq, %56, %57 : vector<5x3xi32>
      %c4_i32 = arith.constant 4 : i32
      %59 = vector.broadcast %c4_i32 : i32 to vector<5x3xi32>
      %60 = arith.cmpi slt, %56, %59 : vector<5x3xi32>
      %61 = arith.andi %58, %60 : vector<5x3xi1>
      %cst_37 = arith.constant 1.000000e+00 : f32
      %cst_38 = arith.constant 0.000000e+00 : f32
      %62 = vector.broadcast %cst_37 : f32 to vector<5x3xf32>
      %63 = vector.broadcast %cst_38 : f32 to vector<5x3xf32>
      %64 = arith.select %61, %62, %63 : vector<5x3xi1>, vector<5x3xf32>
      %cst_39 = arith.constant dense<0.000000e+00> : vector<8x3xf32>
      %65 = tpu.matmul %55, %64, %cst_39 {dimension_numbers = #tpu.dot_dimension_numbers<[1], [0], [0], [1], [0, 0, 1, 1], [], []>} : vector<8x5xf32>, vector<5x3xf32>, vector<8x3xf32> -> vector<8x3xf32>
      %c0_40 = arith.constant 0 : index
      %c0_41 = arith.constant 0 : index
      %66 = vector.load %arg9[%c0_40, %c0_41] : memref<8x3xf32, #tpu.memory_space<vmem>>, vector<8x3xf32>
      tpu.vector_store %arg9[%c0_40, %c0_41], %65 {strides = array<i32>} : memref<8x3xf32, #tpu.memory_space<vmem>>, vector<8x3xf32>,
    } else {
    }
    %c0 = arith.constant 0 : index
    %c0_1 = arith.constant 0 : index
    %c0_2 = arith.constant 0 : index
    %3 = vector.load %arg3[%c0, %c0_1, %c0_2] : memref<1x8x1024xf32, #tpu.memory_space<vmem>>, vector<1x8x1024xf32>
    %4 = vector.shape_cast %3 : vector<1x8x1024xf32> to vector<8x1024xf32>
    %c0_3 = arith.constant 0 : index
    %c0_4 = arith.constant 0 : index
    %c0_5 = arith.constant 0 : index
    %5 = vector.load %arg4[%c0_3, %c0_4, %c0_5] : memref<1x3x1024xf32, #tpu.memory_space<vmem>>, vector<1x3x1024xf32>
    %6 = vector.shape_cast %5 : vector<1x3x1024xf32> to vector<3x1024xf32>
    %cst = arith.constant dense<0xFF800000> : vector<1024xf32>
    %7 = vector.multi_reduction <maximumf>, %4, %cst [0] : vector<8x1024xf32> to vector<1024xf32>
    %8 = vector.shape_cast %7 : vector<1024xf32> to vector<1x1024xf32>
    %9 = vector.broadcast %8 : vector<1x1024xf32> to vector<8x1024xf32>
    %10 = arith.subf %4, %9 : vector<8x1024xf32>
    %11 = math.exp %10 : vector<8x1024xf32>
    %cst_6 = arith.constant dense<0.000000e+00> : vector<1024xf32>
    %12 = vector.multi_reduction <add>, %11, %cst_6 [0] : vector<8x1024xf32> to vector<1024xf32>
    %13 = vector.shape_cast %12 : vector<1024xf32> to vector<1x1024xf32>
    %14 = tpu.reciprocal %13 {approx = true} : vector<1x1024xf32> -> vector<1x1024xf32>
    %cst_7 = arith.constant dense<0xFF800000> : vector<1024xf32>
    %15 = vector.multi_reduction <maximumf>, %6, %cst_7 [0] : vector<3x1024xf32> to vector<1024xf32>
    %16 = vector.shape_cast %15 : vector<1024xf32> to vector<1x1024xf32>
    %cst_8 = arith.constant 0.000000e+00 : f32
    %17 = vector.broadcast %cst_8 : f32 to vector<1x1024xf32>
    %18 = arith.cmpf ogt, %16, %17 : vector<1x1024xf32>
    %cst_9 = arith.constant 0.000000e+00 : f32
    %19 = vector.broadcast %cst_9 : f32 to vector<1x1024xf32>
    %20 = arith.select %18, %14, %19 : vector<1x1024xi1>, vector<1x1024xf32>
    %21 = vector.broadcast %20 : vector<1x1024xf32> to vector<8x1024xf32>
    %22 = arith.mulf %11, %21 : vector<8x1024xf32>
    %23 = arith.truncf %22 : vector<8x1024xf32> to vector<8x1024xbf16>
    %24 = arith.truncf %6 : vector<3x1024xf32> to vector<3x1024xbf16>
    %cst_10 = arith.constant 1.000000e+00 : bf16
    %25 = vector.broadcast %cst_10 : bf16 to vector<1x1024xbf16>
    %26 = tpu.concatenate %24, %25 in 0 : vector<3x1024xbf16>, vector<1x1024xbf16> -> vector<4x1024xbf16>
    %c0_11 = arith.constant 0 : index
    %c0_12 = arith.constant 0 : index
    %27 = vector.load %arg10[%c0_11, %c0_12] : memref<8x4xf32, #tpu.memory_space<vmem>>, vector<8x4xf32>
    %cst_13 = arith.constant dense<0.000000e+00> : vector<8x4xf32>
    %28 = tpu.matmul %23, %26, %cst_13 {dimension_numbers = #tpu.dot_dimension_numbers<[1], [1], [0], [0], [0, 0, 1, 0], [], []>} : vector<8x1024xbf16>, vector<4x1024xbf16>, vector<8x4xf32> -> vector<8x4xf32>
    %29 = arith.addf %27, %28 : vector<8x4xf32>
    %c0_14 = arith.constant 0 : index
    %c0_15 = arith.constant 0 : index
    %30 = vector.load %arg10[%c0_14, %c0_15] : memref<8x4xf32, #tpu.memory_space<vmem>>, vector<8x4xf32>
    tpu.vector_store %arg10[%c0_14, %c0_15], %29 {strides = array<i32>} : memref<8x4xf32, #tpu.memory_space<vmem>>, vector<8x4xf32>,
    %c0_16 = arith.constant 0 : index
    %c0_17 = arith.constant 0 : index
    %31 = vector.load %arg11[%c0_16, %c0_17] : memref<1x3xf32, #tpu.memory_space<vmem>>, vector<1x3xf32>
    %cst_18 = arith.constant dense<0.000000e+00> : vector<1x3xf32>
    %32 = tpu.matmul %25, %24, %cst_18 {dimension_numbers = #tpu.dot_dimension_numbers<[1], [1], [0], [0], [0, 0, 1, 0], [], []>} : vector<1x1024xbf16>, vector<3x1024xbf16>, vector<1x3xf32> -> vector<1x3xf32>
    %33 = arith.addf %31, %32 : vector<1x3xf32>
    %c0_19 = arith.constant 0 : index
    %c0_20 = arith.constant 0 : index
    %34 = vector.load %arg11[%c0_19, %c0_20] : memref<1x3xf32, #tpu.memory_space<vmem>>, vector<1x3xf32>
    tpu.vector_store %arg11[%c0_19, %c0_20], %33 {strides = array<i32>} : memref<1x3xf32, #tpu.memory_space<vmem>>, vector<1x3xf32>,
    %c0_i32_21 = arith.constant 0 : i32
    %35 = arith.cmpi eq, %arg1, %c0_i32_21 : i32
    %36 = arith.extui %35 : i1 to i32
    %c0_i32_22 = arith.constant 0 : i32
    %37 = arith.cmpi ne, %36, %c0_i32_22 : i32
    scf.if %37 {
      %c0_23 = arith.constant 0 : index
      %c0_24 = arith.constant 0 : index
      %38 = vector.load %arg10[%c0_23, %c0_24] : memref<8x4xf32, #tpu.memory_space<vmem>>, vector<8x4xf32>
      %39 = vector.extract_strided_slice %38 {offsets = [0, 0], sizes = [8, 3], strides = [1, 1]} : vector<8x4xf32> to vector<8x3xf32>
      %40 = vector.extract_strided_slice %38 {offsets = [0, 3], sizes = [8, 1], strides = [1, 1]} : vector<8x4xf32> to vector<8x1xf32>
      %c0_25 = arith.constant 0 : index
      %c0_26 = arith.constant 0 : index
      %41 = vector.load %arg11[%c0_25, %c0_26] : memref<1x3xf32, #tpu.memory_space<vmem>>, vector<1x3xf32>
      %42 = vector.broadcast %40 : vector<8x1xf32> to vector<8x3xf32>
      %43 = vector.broadcast %41 : vector<1x3xf32> to vector<8x3xf32>
      %44 = arith.addf %42, %43 : vector<8x3xf32>
      %cst_27 = arith.constant 5.000000e-01 : f32
      %45 = vector.broadcast %cst_27 : f32 to vector<8x3xf32>
      %46 = arith.mulf %44, %45 : vector<8x3xf32>
      %cst_28 = arith.constant 9.99999974E-6 : f32
      %47 = vector.broadcast %cst_28 : f32 to vector<8x3xf32>
      %48 = arith.addf %46, %47 : vector<8x3xf32>
      %49 = tpu.reciprocal %48 {approx = true} : vector<8x3xf32> -> vector<8x3xf32>
      %50 = arith.mulf %39, %49 : vector<8x3xf32>
      %c0_29 = arith.constant 0 : index
      %c0_30 = arith.constant 0 : index
      %51 = vector.load %arg9[%c0_29, %c0_30] : memref<8x3xf32, #tpu.memory_space<vmem>>, vector<8x3xf32>
      %c0_31 = arith.constant 0 : index
      %c0_32 = arith.constant 0 : index
      %c0_33 = arith.constant 0 : index
      %52 = vector.load %arg6[%c0_31, %c0_32, %c0_33] : memref<1x8x3xf32, #tpu.memory_space<vmem>>, vector<1x8x3xf32>
      %53 = vector.shape_cast %52 : vector<1x8x3xf32> to vector<8x3xf32>
      %54 = vector.shape_cast %51 : vector<8x3xf32> to vector<1x8x3xf32>
      tpu.vector_store %arg6[%c0_31, %c0_32, %c0_33], %54 {strides = array<i32>} : memref<1x8x3xf32, #tpu.memory_space<vmem>>, vector<1x8x3xf32>,
      %c0_34 = arith.constant 0 : index
      %c0_35 = arith.constant 0 : index
      %c0_36 = arith.constant 0 : index
      %55 = vector.load %arg7[%c0_34, %c0_35, %c0_36] : memref<1x8x3xf32, #tpu.memory_space<vmem>>, vector<1x8x3xf32>
      %56 = vector.shape_cast %55 : vector<1x8x3xf32> to vector<8x3xf32>
      %57 = vector.shape_cast %50 : vector<8x3xf32> to vector<1x8x3xf32>
      tpu.vector_store %arg7[%c0_34, %c0_35, %c0_36], %57 {strides = array<i32>} : memref<1x8x3xf32, #tpu.memory_space<vmem>>, vector<1x8x3xf32>,
      %cst_37 = arith.constant 0.000000e+00 : f32
      %58 = vector.broadcast %cst_37 : f32 to vector<8x3xf32>
      %59 = arith.subf %58, %50 : vector<8x3xf32>
      %60 = arith.mulf %59, %51 : vector<8x3xf32>
      %c0_38 = arith.constant 0 : index
      %c0_39 = arith.constant 0 : index
      %c0_40 = arith.constant 0 : index
      %61 = vector.load %arg8[%c0_38, %c0_39, %c0_40] : memref<1x8x3xf32, #tpu.memory_space<vmem>>, vector<1x8x3xf32>
      %62 = vector.shape_cast %61 : vector<1x8x3xf32> to vector<8x3xf32>
      %63 = vector.shape_cast %60 : vector<8x3xf32> to vector<1x8x3xf32>
      tpu.vector_store %arg8[%c0_38, %c0_39, %c0_40], %63 {strides = array<i32>} : memref<1x8x3xf32, #tpu.memory_space<vmem>>, vector<1x8x3xf32>,
    } else {
    }
    return
  }
  func.func @transform_0(%arg0: i32, %arg1: i32) -> (i32, i32, i32) {
    %c0_i32 = arith.constant 0 : i32
    %c0_i32_0 = arith.constant 0 : i32
    %c0_i32_1 = arith.constant 0 : i32
    return %arg0, %c0_i32, %c0_i32_0 : i32, i32, i32
  }
  func.func @transform_1(%arg0: i32, %arg1: i32) -> (i32, i32, i32) {
    %c0_i32 = arith.constant 0 : i32
    %c0_i32_0 = arith.constant 0 : i32
    return %arg0, %c0_i32, %arg1 : i32, i32, i32
  }
  func.func @transform_2(%arg0: i32, %arg1: i32) -> (i32, i32, i32) {
    %c0_i32 = arith.constant 0 : i32
    %c0_i32_0 = arith.constant 0 : i32
    return %arg0, %c0_i32, %arg1 : i32, i32, i32
  }
  func.func @transform_3(%arg0: i32, %arg1: i32) -> (i32, i32, i32) {
    %c0_i32 = arith.constant 0 : i32
    %c0_i32_0 = arith.constant 0 : i32
    %c0_i32_1 = arith.constant 0 : i32
    return %arg0, %c0_i32, %c0_i32_0 : i32, i32, i32
  }
  func.func @transform_4(%arg0: i32, %arg1: i32) -> (i32, i32, i32) {
    %c0_i32 = arith.constant 0 : i32
    %c0_i32_0 = arith.constant 0 : i32
    %c0_i32_1 = arith.constant 0 : i32
    return %arg0, %c0_i32, %c0_i32_0 : i32, i32, i32
  }
  func.func @transform_5(%arg0: i32, %arg1: i32) -> (i32, i32, i32) {
    %c0_i32 = arith.constant 0 : i32
    %c0_i32_0 = arith.constant 0 : i32
    %c0_i32_1 = arith.constant 0 : i32
    return %arg0, %c0_i32, %c0_i32_0 : i32, i32, i32
  }
  func.func @transform_6(%arg0: i32, %arg1: i32) -> (i32, i32, i32) {
    %c0_i32 = arith.constant 0 : i32
    %c0_i32_0 = arith.constant 0 : i32
    %c0_i32_1 = arith.constant 0 : i32
    return %arg0, %c0_i32, %c0_i32_0 : i32, i32, i32
  }
}

</mosaic_0001>

<llo_original>
// kernel: tpu_custom_call.1
$region0: #{tpu_custom_call.1}
  #allocation0 [shape = 'u32[]', space=smem, size = 0x4, offset = 0x4, fixed_abs, tag = 'smem constant byte address 0x4 - core index']
  #allocation1 [shape = 'u32[144,128]{1,0:T(1,128)}', space=vmem, size = 0x12000, scoped, tag = 'internal scratch']
  #allocation2 [shape = 'f32[8,3]{1,0:T(8,128)}', space=vmem, size = 0x1000, scoped, tag = 'scratch operand']
  #allocation3 [shape = 'f32[8,4]{1,0:T(8,128)}', space=vmem, size = 0x1000, scoped, tag = 'scratch operand']
  #allocation4 [shape = 'f32[1,3]{1,0:T(1,128)}', space=vmem, size = 0x200, scoped, tag = 'scratch operand']
  %s0 = inlined_call_operand.vmem [shape: f32[2,8,5], index: 0, kind: input, shape index: {}]
  %s1 = inlined_call_operand.vmem [shape: f32[2,8,1024], index: 1, kind: input, shape index: {}]
  %s2 = inlined_call_operand.vmem [shape: f32[2,3,1024], index: 2, kind: input, shape index: {}]
  %s3 = inlined_call_operand.vmem [shape: s32[2,1,3], index: 3, kind: input, shape index: {}]
  %s4 = inlined_call_operand.vmem [shape: f32[2,8,3], index: 4, kind: output, shape index: {0}]
  %s5 = inlined_call_operand.vmem [shape: f32[2,8,3], index: 5, kind: output, shape index: {1}]
  %s6 = inlined_call_operand.vmem [shape: f32[2,8,3], index: 6, kind: output, shape index: {2}]
  %7 = xla_tuple %s4, %s5, %s6
  %s8 = sld [smem:[#allocation0]]
  $region73: #{tpu_custom_call.1} parent=0
    _
  %s10 = ssub.s32 1, %s8
  %s11 = scalar_select 0, %s10, %s8
  loop: start=0, step=1, limit=4
  $region2: #{tpu_custom_call.1} parent=0 // loop_pre_header
    _
  $region3: #{tpu_custom_call.1} parent=0 // loop_header
    %s13 = sphi 0, %s17
    %p14 = scmp.ge.s32.totalorder %s13, 4
    %s20 = sphi 0, %s32
    %s21 = sphi 0, %s28
    %s22 = sphi 0, %s20
    %s23 = sphi 0, %s21
    %s24 = sphi 0, %s22
    %s25 = sphi 0, %s23
    %s35 = sphi 0, %s37
    %s38 = sphi 0, %s35
    %s39 = sphi 0, %s38
    %s55 = sphi 0, %s39
    %s63 = sphi 0, %s65
    %s66 = sphi 0, %s63
    %s67 = sphi 0, %s66
    %s83 = sphi 0, %s67
    %s91 = sphi 0, %s93
    %s94 = sphi 0, %s91
    %s95 = sphi 0, %s94
    %s111 = sphi 0, %s95
    %s117 = sphi 0, %s119
    %s120 = sphi 0, %s117
    %s121 = sphi 0, %s120
    %s137 = sphi 0, %s121
    %s143 = sphi 0, %s145
    %s146 = sphi 0, %s143
    %s147 = sphi 0, %s146
    %s163 = sphi 0, %s147
    %s169 = sphi 0, %s171
    %s172 = sphi 0, %s169
    %s173 = sphi 0, %s172
    %s189 = sphi 0, %s173
    %s195 = sphi 0, %s197
    %s198 = sphi 0, %s195
    %s199 = sphi 0, %s198
    %s215 = sphi 0, %s199
  $region4: #{tpu_custom_call.1} parent=0 // loop_header_branch
    %16 = sbr.rel (%p14) target = $region8
  $region5: #{tpu_custom_call.1} parent=0 // loop_body
    %s18 = ssub.s32 %s13, 1
    %s19 = ssub.s32 %s13, 2
    %s26 = sadd.s32 1, %s21
    %p27 = scmp.ge.s32.totalorder %s26, 1
    %s28 = scalar_select %p27, 0, %s26
    %s29 = sadd.s32 1, %s20
    %s30 = scalar_select %p27, %s29, %s20
    %p31 = scmp.ge.s32.totalorder %s30, 2
    %s32 = scalar_select %p31, 0, %s30
    %s33 = ssub.s32 %s20, %s32
    %p34 = scmp.eq.s32.totalorder %s33, 0
    %s36 = sadd.s32 %s35, 1
    %s37 = scalar_select %p34, %s35, %s36
    %p40 = pneg %p34
    %p41 = scmp.eq.s32.totalorder %s13, 1
    %p42 = por %p40, %p41
    %p43 = scmp.ne.s32.totalorder %s35, %s38
    %p44 = scmp.eq.s32.totalorder %s13, 0
    %p45 = por %p43, %p44
    %p46 = scmp.ne.s32.totalorder %s35, %s38
    %p47 = scmp.eq.s32.totalorder %s18, 1
    %p48 = por %p46, %p47
    %p49 = scmp.ne.s32.totalorder %s38, %s39
    %p50 = scmp.eq.s32.totalorder %s18, 0
    %p51 = por %p49, %p50
    %p52 = scmp.ne.s32.totalorder %s38, %s39
    %p53 = scmp.eq.s32.totalorder %s19, 1
    %p54 = por %p52, %p53
    %p56 = scmp.ne.s32.totalorder %s39, %s55
    %p57 = scmp.eq.s32.totalorder %s19, 0
    %p58 = por %p56, %p57
    %s59 = ssub.s32 %s20, %s32
    %s60 = ssub.s32 %s21, %s28
    %s61 = sor.u32 %s59, %s60
    %p62 = scmp.eq.s32.totalorder %s61, 0
    %s64 = sadd.s32 %s63, 1
    %s65 = scalar_select %p62, %s63, %s64
    %p68 = pneg %p62
    %p69 = scmp.eq.s32.totalorder %s13, 1
    %p70 = por %p68, %p69
    %p71 = scmp.ne.s32.totalorder %s63, %s66
    %p72 = scmp.eq.s32.totalorder %s13, 0
    %p73 = por %p71, %p72
    %p74 = scmp.ne.s32.totalorder %s63, %s66
    %p75 = scmp.eq.s32.totalorder %s18, 1
    %p76 = por %p74, %p75
    %p77 = scmp.ne.s32.totalorder %s66, %s67
    %p78 = scmp.eq.s32.totalorder %s18, 0
    %p79 = por %p77, %p78
    %p80 = scmp.ne.s32.totalorder %s66, %s67
    %p81 = scmp.eq.s32.totalorder %s19, 1
    %p82 = por %p80, %p81
    %p84 = scmp.ne.s32.totalorder %s67, %s83
    %p85 = scmp.eq.s32.totalorder %s19, 0
    %p86 = por %p84, %p85
    %s87 = ssub.s32 %s20, %s32
    %s88 = ssub.s32 %s21, %s28
    %s89 = sor.u32 %s87, %s88
    %p90 = scmp.eq.s32.totalorder %s89, 0
    %s92 = sadd.s32 %s91, 1
    %s93 = scalar_select %p90, %s91, %s92
    %p96 = pneg %p90
    %p97 = scmp.eq.s32.totalorder %s13, 1
    %p98 = por %p96, %p97
    %p99 = scmp.ne.s32.totalorder %s91, %s94
    %p100 = scmp.eq.s32.totalorder %s13, 0
    %p101 = por %p99, %p100
    %p102 = scmp.ne.s32.totalorder %s91, %s94
    %p103 = scmp.eq.s32.totalorder %s18, 1
    %p104 = por %p102, %p103
    %p105 = scmp.ne.s32.totalorder %s94, %s95
    %p106 = scmp.eq.s32.totalorder %s18, 0
    %p107 = por %p105, %p106
    %p108 = scmp.ne.s32.totalorder %s94, %s95
    %p109 = scmp.eq.s32.totalorder %s19, 1
    %p110 = por %p108, %p109
    %p112 = scmp.ne.s32.totalorder %s95, %s111
    %p113 = scmp.eq.s32.totalorder %s19, 0
    %p114 = por %p112, %p113
    %s115 = ssub.s32 %s20, %s32
    %p116 = scmp.eq.s32.totalorder %s115, 0
    %s118 = sadd.s32 %s117, 1
    %s119 = scalar_select %p116, %s117, %s118
    %p122 = pneg %p116
    %p123 = scmp.eq.s32.totalorder %s13, 1
    %p124 = por %p122, %p123
    %p125 = scmp.ne.s32.totalorder %s117, %s120
    %p126 = scmp.eq.s32.totalorder %s13, 0
    %p127 = por %p125, %p126
    %p128 = scmp.ne.s32.totalorder %s117, %s120
    %p129 = scmp.eq.s32.totalorder %s18, 1
    %p130 = por %p128, %p129
    %p131 = scmp.ne.s32.totalorder %s120, %s121
    %p132 = scmp.eq.s32.totalorder %s18, 0
    %p133 = por %p131, %p132
    %p134 = scmp.ne.s32.totalorder %s120, %s121
    %p135 = scmp.eq.s32.totalorder %s19, 1
    %p136 = por %p134, %p135
    %p138 = scmp.ne.s32.totalorder %s121, %s137
    %p139 = scmp.eq.s32.totalorder %s19, 0
    %p140 = por %p138, %p139
    %s141 = ssub.s32 %s20, %s32
    %p142 = scmp.eq.s32.totalorder %s141, 0
    %s144 = sadd.s32 %s143, 1
    %s145 = scalar_select %p142, %s143, %s144
    %p148 = pneg %p142
    %p149 = scmp.eq.s32.totalorder %s13, 1
    %p150 = por %p148, %p149
    %p151 = scmp.ne.s32.totalorder %s143, %s146
    %p152 = scmp.eq.s32.totalorder %s13, 0
    %p153 = por %p151, %p152
    %p154 = scmp.ne.s32.totalorder %s143, %s146
    %p155 = scmp.eq.s32.totalorder %s18, 1
    %p156 = por %p154, %p155
    %p157 = scmp.ne.s32.totalorder %s146, %s147
    %p158 = scmp.eq.s32.totalorder %s18, 0
    %p159 = por %p157, %p158
    %p160 = scmp.ne.s32.totalorder %s146, %s147
    %p161 = scmp.eq.s32.totalorder %s19, 1
    %p162 = por %p160, %p161
    %p164 = scmp.ne.s32.totalorder %s147, %s163
    %p165 = scmp.eq.s32.totalorder %s19, 0
    %p166 = por %p164, %p165
    %s167 = ssub.s32 %s20, %s32
    %p168 = scmp.eq.s32.totalorder %s167, 0
    %s170 = sadd.s32 %s169, 1
    %s171 = scalar_select %p168, %s169, %s170
    %p174 = pneg %p168
    %p175 = scmp.eq.s32.totalorder %s13, 1
    %p176 = por %p174, %p175
    %p177 = scmp.ne.s32.totalorder %s169, %s172
    %p178 = scmp.eq.s32.totalorder %s13, 0
    %p179 = por %p177, %p178
    %p180 = scmp.ne.s32.totalorder %s169, %s172
    %p181 = scmp.eq.s32.totalorder %s18, 1
    %p182 = por %p180, %p181
    %p183 = scmp.ne.s32.totalorder %s172, %s173
    %p184 = scmp.eq.s32.totalorder %s18, 0
    %p185 = por %p183, %p184
    %p186 = scmp.ne.s32.totalorder %s172, %s173
    %p187 = scmp.eq.s32.totalorder %s19, 1
    %p188 = por %p186, %p187
    %p190 = scmp.ne.s32.totalorder %s173, %s189
    %p191 = scmp.eq.s32.totalorder %s19, 0
    %p192 = por %p190, %p191
    %s193 = ssub.s32 %s20, %s32
    %p194 = scmp.eq.s32.totalorder %s193, 0
    %s196 = sadd.s32 %s195, 1
    %s197 = scalar_select %p194, %s195, %s196
    %p200 = pneg %p194
    %p201 = scmp.eq.s32.totalorder %s13, 1
    %p202 = por %p200, %p201
    %p203 = scmp.ne.s32.totalorder %s195, %s198
    %p204 = scmp.eq.s32.totalorder %s13, 0
    %p205 = por %p203, %p204
    %p206 = scmp.ne.s32.totalorder %s195, %s198
    %p207 = scmp.eq.s32.totalorder %s18, 1
    %p208 = por %p206, %p207
    %p209 = scmp.ne.s32.totalorder %s198, %s199
    %p210 = scmp.eq.s32.totalorder %s18, 0
    %p211 = por %p209, %p210
    %p212 = scmp.ne.s32.totalorder %s198, %s199
    %p213 = scmp.eq.s32.totalorder %s19, 1
    %p214 = por %p212, %p213
    %p216 = scmp.ne.s32.totalorder %s199, %s215
    %p217 = scmp.eq.s32.totalorder %s19, 0
    %p218 = por %p216, %p217
    %p219 = scmp.le.s32.totalorder 1, %s13
    %p220 = scmp.lt.s32.totalorder %s13, 3
    %p221 = pnand %p219, %p220
    %p222 = pneg %p221
    // Predicated region
    $region9: #{tpu_custom_call.1} parent=5 // pred_check
      _
    $region10: #{tpu_custom_call.1} parent=5 // pred_check_branch
      %224 = sbr.rel (%p221) target = $region12
    $region11: #{tpu_custom_call.1} parent=5 // pred_region
      %s225 = ssub.s32 %s13, 1
    $region12: #{tpu_custom_call.1} parent=5 // pred_fallthru
      _
    %p226 = scmp.lt.s32.totalorder %s13, 2
    // Predicated region
    $region13: #{tpu_custom_call.1} parent=5 // pred_check
      %p227 = pneg %p226
    $region14: #{tpu_custom_call.1} parent=5 // pred_check_branch
      %229 = sbr.rel (%p227) target = $region16
    $region15: #{tpu_custom_call.1} parent=5 // pred_region
      // Predicated region
      $region17: #{tpu_custom_call.1} parent=15 // pred_check
        %p230 = pneg %p45
      $region18: #{tpu_custom_call.1} parent=15 // pred_check_branch
        %232 = sbr.rel (%p230) target = $region20
      $region19: #{tpu_custom_call.1} parent=15 // pred_region
        %p233 = scmp.lt.s32.totalorder %s20, 1
        %s234 = scalar_select %p233, %s20, 1
        %s235 = smul.addr %s234, 8
        %s236 = scalar_lea.vmem %s0, %s235
      $region20: #{tpu_custom_call.1} parent=15 // pred_fallthru
        _
      // Predicated region
      $region21: #{tpu_custom_call.1} parent=15 // pred_check
        %p237 = pneg %p73
      $region22: #{tpu_custom_call.1} parent=15 // pred_check_branch
        %239 = sbr.rel (%p237) target = $region24
      $region23: #{tpu_custom_call.1} parent=15 // pred_region
        %s240 = smul.u32 8, %s21
        %p241 = scmp.lt.s32.totalorder %s20, 1
        %s242 = scalar_select %p241, %s20, 1
        %p243 = scmp.lt.s32.totalorder %s240, 7
        %s244 = scalar_select %p243, %s240, 7
        %s245 = smul.addr %s242, 8
        %s246 = sadd.s32 %s244, %s245
        %s247 = smul.addr %s246, 8
        %s248 = scalar_lea.vmem %s1, %s247
        %s249 = smul.u32 8, %s21
      $region24: #{tpu_custom_call.1} parent=15 // pred_fallthru
        _
      // Predicated region
      $region25: #{tpu_custom_call.1} parent=15 // pred_check
        %p250 = pneg %p101
      $region26: #{tpu_custom_call.1} parent=15 // pred_check_branch
        %252 = sbr.rel (%p250) target = $region28
      $region27: #{tpu_custom_call.1} parent=15 // pred_region
        %s253 = smul.u32 8, %s21
        %p254 = scmp.lt.s32.totalorder %s20, 1
        %s255 = scalar_select %p254, %s20, 1
        %p256 = scmp.lt.s32.totalorder %s253, 7
        %s257 = scalar_select %p256, %s253, 7
        %s258 = smul.addr %s255, 8
        %s259 = sadd.s32 %s257, %s258
        %s260 = smul.addr %s259, 4
        %s261 = scalar_lea.vmem %s2, %s260
        %s262 = smul.u32 8, %s21
      $region28: #{tpu_custom_call.1} parent=15 // pred_fallthru
        _
      // Predicated region
      $region29: #{tpu_custom_call.1} parent=15 // pred_check
        %p263 = pneg %p127
      $region30: #{tpu_custom_call.1} parent=15 // pred_check_branch
        %265 = sbr.rel (%p263) target = $region32
      $region31: #{tpu_custom_call.1} parent=15 // pred_region
        %p266 = scmp.lt.s32.totalorder %s20, 1
        %s267 = scalar_select %p266, %s20, 1
        %s268 = scalar_lea.vmem %s3, %s267
      $region32: #{tpu_custom_call.1} parent=15 // pred_fallthru
        _
    $region16: #{tpu_custom_call.1} parent=5 // pred_fallthru
      _
    %p269 = scmp.le.s32.totalorder 1, %s13
    %p270 = scmp.lt.s32.totalorder %s13, 3
    %p271 = pnand %p269, %p270
    %p272 = pneg %p271
    // Predicated region
    $region33: #{tpu_custom_call.1} parent=5 // pred_check
      _
    $region34: #{tpu_custom_call.1} parent=5 // pred_check_branch
      %274 = sbr.rel (%p271) target = $region36
    $region35: #{tpu_custom_call.1} parent=5 // pred_region
      %s275 = ssub.s32 %s13, 1
      %p276 = scmp.lt.s32.totalorder %s22, 1
      %s277 = scalar_select %p276, %s22, 1
      %s278 = smul.addr %s277, 8
      %s279 = scalar_lea.vmem %s0, %s278
      %p280 = pneg %p51
      %p281 = pneg %p48
      %s282 = smul.u32 8, %s23
      %p283 = scmp.lt.s32.totalorder %s22, 1
      %s284 = scalar_select %p283, %s22, 1
      %p285 = scmp.lt.s32.totalorder %s282, 7
      %s286 = scalar_select %p285, %s282, 7
      %s287 = smul.addr %s284, 8
      %s288 = sadd.s32 %s286, %s287
      %s289 = smul.addr %s288, 8
      %s290 = scalar_lea.vmem %s1, %s289
      %p291 = pneg %p79
      %p292 = pneg %p76
      %s293 = smul.u32 8, %s23
      %p294 = scmp.lt.s32.totalorder %s22, 1
      %s295 = scalar_select %p294, %s22, 1
      %p296 = scmp.lt.s32.totalorder %s293, 7
      %s297 = scalar_select %p296, %s293, 7
      %s298 = smul.addr %s295, 8
      %s299 = sadd.s32 %s297, %s298
      %s300 = smul.addr %s299, 4
      %s301 = scalar_lea.vmem %s2, %s300
      %p302 = pneg %p107
      %p303 = pneg %p104
      %p304 = scmp.lt.s32.totalorder %s22, 1
      %s305 = scalar_select %p304, %s22, 1
      %s306 = scalar_lea.vmem %s3, %s305
      %p307 = pneg %p133
      %p308 = pneg %p130
      %p309 = pneg %p159
      %p310 = pneg %p156
      %p311 = scmp.lt.s32.totalorder %s22, 1
      %s312 = scalar_select %p311, %s22, 1
      %s313 = smul.addr %s312, 8
      %s314 = scalar_lea.vmem %s4, %s313
      %p315 = pneg %p185
      %p316 = pneg %p182
      %p317 = scmp.lt.s32.totalorder %s22, 1
      %s318 = scalar_select %p317, %s22, 1
      %s319 = smul.addr %s318, 8
      %s320 = scalar_lea.vmem %s5, %s319
      %p321 = pneg %p211
      %p322 = pneg %p208
      %p323 = scmp.lt.s32.totalorder %s22, 1
      %s324 = scalar_select %p323, %s22, 1
      %s325 = smul.addr %s324, 8
      %s326 = scalar_lea.vmem %s6, %s325
      %p327 = scmp.lt.s32.totalorder %s22, 1
      %s328 = scalar_select %p327, %s22, 1
      %s329 = smul.addr %s328, 8
      %s330 = scalar_lea.vmem %s0, %s329
      %s331 = smul.u32 8, %s23
      %p332 = scmp.lt.s32.totalorder %s22, 1
      %s333 = scalar_select %p332, %s22, 1
      %p334 = scmp.lt.s32.totalorder %s331, 7
      %s335 = scalar_select %p334, %s331, 7
      %s336 = smul.addr %s333, 8
      %s337 = sadd.s32 %s335, %s336
      %s338 = smul.addr %s337, 8
      %s339 = scalar_lea.vmem %s1, %s338
      %s340 = smul.u32 8, %s23
      %s341 = smul.u32 8, %s23
      %p342 = scmp.lt.s32.totalorder %s22, 1
      %s343 = scalar_select %p342, %s22, 1
      %p344 = scmp.lt.s32.totalorder %s341, 7
      %s345 = scalar_select %p344, %s341, 7
      %s346 = smul.addr %s343, 8
      %s347 = sadd.s32 %s345, %s346
      %s348 = smul.addr %s347, 4
      %s349 = scalar_lea.vmem %s2, %s348
      %s350 = smul.u32 8, %s23
      %p351 = scmp.lt.s32.totalorder %s22, 1
      %s352 = scalar_select %p351, %s22, 1
      %s353 = scalar_lea.vmem %s3, %s352
      %p354 = scmp.lt.s32.totalorder %s22, 1
      %s355 = scalar_select %p354, %s22, 1
      %s356 = smul.addr %s355, 8
      %s357 = scalar_lea.vmem %s4, %s356
      %p358 = scmp.lt.s32.totalorder %s22, 1
      %s359 = scalar_select %p358, %s22, 1
      %s360 = smul.addr %s359, 8
      %s361 = scalar_lea.vmem %s5, %s360
      %p362 = scmp.lt.s32.totalorder %s22, 1
      %s363 = scalar_select %p362, %s22, 1
      %s364 = smul.addr %s363, 8
      %s365 = scalar_lea.vmem %s6, %s364
      %p368 = scmp.eq.s32.totalorder %s23, 0
      // Predicated region
      $region37: #{tpu_custom_call.1} parent=35 // pred_check
        %p369 = pneg %p368
      $region38: #{tpu_custom_call.1} parent=35 // pred_check_branch
        %371 = sbr.rel (%p369) target = $region40
      $region39: #{tpu_custom_call.1} parent=35 // pred_region
        %vm372 = vcmask 31744
        %373 = vst.msk [vmem:[#allocation3] sm:$0xff] %vm372, 0.0
        %vm374 = vcmask 16384
        %375 = vst.msk [vmem:[#allocation4] sm:$0x1] %vm374, 0.0
        %v376 = vld [vmem:[%s330] sm:$0xff]
        %v377 = vld [vmem:[%s353] sm:$0x1]
        %vm378 = vcmask 39936
        %v379 = vsel %vm378, %v376, -inf
        %380 = vmax.xlane.f32.xlu0 %v379
        %v381 = vpop.xlane.xlu0 %380
        %v382 = vsub.f32 %v376, %v381
        %v383 = vmul.f32 %v382, 1.442695
        %v384 = vpow.pop %v383
        %v385 = vsel %vm378, %v384, 0.0
        %386 = vadd.xlane.f32.xlu0 %v385
        %v387 = vpop.xlane.xlu0 %386
        %v388 = vrcp.pop %v387
        %v389 = vmul.f32 %v384, %v388
        %v390 = vlaneseq
        %v391 = vshrl.u32 %v390, 7
        %v392 = vlaneseq
        %v393 = vshrl.u32 %v392, 7
        %v394 = vsub.s32 0, %v393
        %v395 = vrot.slane %v377, %v394
        %vm396 = vcmp.eq.s32.totalorder %v391, %v395
        %vm397 = vcmp.lt.s32.totalorder %v391, 4
        %vm398 = vmand %vm396, %vm397
        %v399 = vsel %vm398, 1.0, 0.0
        %v401 = vsel %vm378, %v389, 0
        %vm403 = vcmask 1044480
        %v405 = vsel %vm403, %v399, 0
        %407 = vmatprep.subr.mxu0 0.0
        %408 = vmatpush1.msra.mxu0 %v405
        %409 = vmatprep.subr.mxu0 0.0
        %410 = vmatpush1.msra.mxu0 0.0
        %411 = vmatprep.subr.mxu0 0.0
        %412 = vmatpush1.msra.mxu0 0.0
        %413 = vmatprep.subr.mxu0 0.0
        %414 = vmatpush1.msra.mxu0 0.0
        %415 = vmatprep.subr.mxu0 0.0
        %416 = vmatpush1.msra.mxu0 0.0
        %417 = vmatprep.subr.mxu0 0.0
        %418 = vmatpush1.msra.mxu0 0.0
        %419 = vmatprep.subr.mxu0 0.0
        %420 = vmatpush1.msra.mxu0 0.0
        %421 = vmatprep.subr.mxu0 0.0
        %422 = vmatpush1.msra.mxu0 0.0
        %423 = vmatprep.subr.mxu0 0.0
        %424 = vmatpush1.msra.mxu0 0.0
        %425 = vmatprep.subr.mxu0 0.0
        %426 = vmatpush1.msra.mxu0 0.0
        %427 = vmatprep.subr.mxu0 0.0
        %428 = vmatpush1.msra.mxu0 0.0
        %429 = vmatprep.subr.mxu0 0.0
        %430 = vmatpush1.msra.mxu0 0.0
        %431 = vmatprep.subr.mxu0 0.0
        %432 = vmatpush1.msra.mxu0 0.0
        %433 = vmatprep.subr.mxu0 0.0
        %434 = vmatpush1.msra.mxu0 0.0
        %435 = vmatprep.subr.mxu0 0.0
        %436 = vmatpush1.msra.mxu0 0.0
        %437 = vmatprep.subr.mxu0 0.0
        %438 = vmatpush1.msra.mxu0 0.0
        %439 = vmatprep.subr.mxu0 0.0
        %440 = vmatpush1.msra.mxu0 0.0
        %441 = vmatprep.subr.mxu0 0.0
        %442 = vmatpush1.msra.mxu0 0.0
        %443 = vmatprep.subr.mxu0 0.0
        %444 = vmatpush1.msra.mxu0 0.0
        %445 = vmatprep.subr.mxu0 0.0
        %446 = vmatpush1.msra.mxu0 0.0
        %447 = vmatprep.subr.mxu0 0.0
        %448 = vmatpush1.msra.mxu0 0.0
        %449 = vmatprep.subr.mxu0 0.0
        %450 = vmatpush1.msra.mxu0 0.0
        %451 = vmatprep.subr.mxu0 0.0
        %452 = vmatpush1.msra.mxu0 0.0
        %453 = vmatprep.subr.mxu0 0.0
        %454 = vmatpush1.msra.mxu0 0.0
        %455 = vmatprep.subr.mxu0 0.0
        %456 = vmatpush1.msra.mxu0 0.0
        %457 = vmatprep.subr.mxu0 0.0
        %458 = vmatpush1.msra.mxu0 0.0
        %459 = vmatprep.subr.mxu0 0.0
        %460 = vmatpush1.msra.mxu0 0.0
        %461 = vmatprep.subr.mxu0 0.0
        %462 = vmatpush1.msra.mxu0 0.0
        %463 = vmatprep.subr.mxu0 0.0
        %464 = vmatpush1.msra.mxu0 0.0
        %465 = vmatprep.subr.mxu0 0.0
        %466 = vmatpush1.msra.mxu0 0.0
        %467 = vmatprep.subr.mxu0 0.0
        %468 = vmatpush1.msra.mxu0 0.0
        %469 = vmatprep.subr.mxu0 0.0
        %470 = vmatpush1.msra.mxu0 0.0
        %471 = vmatprep.mubr.f32.mxu0 0.0
        %472 = vmatmul.mubr.f32.gmra.mrb[0].mxu0 %v401
        %v473 = vpop.f32.mrb[0].mxu0
        %v474 = vadd.f32 0.0, %v473
        %v475 = vpop.f32.mrb[0].mxu0
        %476 = vdwg.mxu0
        %vm477 = vcmask 23552
        %478 = vst.msk [vmem:[#allocation2] sm:$0xff] %vm477, %v474
      $region40: #{tpu_custom_call.1} parent=35 // pred_fallthru
        _
      %v479 = vld [vmem:[%s339] sm:$0xff]
      %v480 = vld [vmem:[%s339 + $0x8] sm:$0xff]
      %v481 = vld [vmem:[%s339 + $0x10] sm:$0xff]
      %v482 = vld [vmem:[%s339 + $0x18] sm:$0xff]
      %v483 = vld [vmem:[%s339 + $0x20] sm:$0xff]
      %v484 = vld [vmem:[%s339 + $0x28] sm:$0xff]
      %v485 = vld [vmem:[%s339 + $0x30] sm:$0xff]
      %v486 = vld [vmem:[%s339 + $0x38] sm:$0xff]
      %v487 = vld [vmem:[%s349] sm:$0x77]
      %v488 = vld [vmem:[%s349 + $0x8] sm:$0x77]
      %v489 = vld [vmem:[%s349 + $0x10] sm:$0x77]
      %v490 = vld [vmem:[%s349 + $0x18] sm:$0x77]
      %v491 = vrot.slane %v479, 4
      %v492 = vmax.f32 %v479, %v491
      %v493 = vrot.slane %v492, 2
      %v494 = vmax.f32 %v492, %v493
      %v495 = vrot.slane %v494, 1
      %v496 = vmax.f32 %v494, %v495
      %v497 = vrot.slane %v480, 4
      %v498 = vmax.f32 %v480, %v497
      %v499 = vrot.slane %v498, 2
      %v500 = vmax.f32 %v498, %v499
      %v501 = vrot.slane %v500, 1
      %v502 = vmax.f32 %v500, %v501
      %v503 = vrot.slane %v481, 4
      %v504 = vmax.f32 %v481, %v503
      %v505 = vrot.slane %v504, 2
      %v506 = vmax.f32 %v504, %v505
      %v507 = vrot.slane %v506, 1
      %v508 = vmax.f32 %v506, %v507
      %v509 = vrot.slane %v482, 4
      %v510 = vmax.f32 %v482, %v509
      %v511 = vrot.slane %v510, 2
      %v512 = vmax.f32 %v510, %v511
      %v513 = vrot.slane %v512, 1
      %v514 = vmax.f32 %v512, %v513
      %v515 = vrot.slane %v483, 4
      %v516 = vmax.f32 %v483, %v515
      %v517 = vrot.slane %v516, 2
      %v518 = vmax.f32 %v516, %v517
      %v519 = vrot.slane %v518, 1
      %v520 = vmax.f32 %v518, %v519
      %v521 = vrot.slane %v484, 4
      %v522 = vmax.f32 %v484, %v521
      %v523 = vrot.slane %v522, 2
      %v524 = vmax.f32 %v522, %v523
      %v525 = vrot.slane %v524, 1
      %v526 = vmax.f32 %v524, %v525
      %v527 = vrot.slane %v485, 4
      %v528 = vmax.f32 %v485, %v527
      %v529 = vrot.slane %v528, 2
      %v530 = vmax.f32 %v528, %v529
      %v531 = vrot.slane %v530, 1
      %v532 = vmax.f32 %v530, %v531
      %v533 = vrot.slane %v486, 4
      %v534 = vmax.f32 %v486, %v533
      %v535 = vrot.slane %v534, 2
      %v536 = vmax.f32 %v534, %v535
      %v537 = vrot.slane %v536, 1
      %v538 = vmax.f32 %v536, %v537
      %v539 = vsub.f32 %v479, %v496
      %v540 = vsub.f32 %v480, %v502
      %v541 = vsub.f32 %v481, %v508
      %v542 = vsub.f32 %v482, %v514
      %v543 = vsub.f32 %v483, %v520
      %v544 = vsub.f32 %v484, %v526
      %v545 = vsub.f32 %v485, %v532
      %v546 = vsub.f32 %v486, %v538
      %v547 = vmul.f32 %v539, 1.442695
      %v548 = vpow.pop %v547
      %v549 = vmul.f32 %v540, 1.442695
      %v550 = vpow.pop %v549
      %v551 = vmul.f32 %v541, 1.442695
      %v552 = vpow.pop %v551
      %v553 = vmul.f32 %v542, 1.442695
      %v554 = vpow.pop %v553
      %v555 = vmul.f32 %v543, 1.442695
      %v556 = vpow.pop %v555
      %v557 = vmul.f32 %v544, 1.442695
      %v558 = vpow.pop %v557
      %v559 = vmul.f32 %v545, 1.442695
      %v560 = vpow.pop %v559
      %v561 = vmul.f32 %v546, 1.442695
      %v562 = vpow.pop %v561
      %v563 = vrot.slane %v548, 4
      %v564 = vadd.f32 %v548, %v563
      %v565 = vrot.slane %v564, 2
      %v566 = vadd.f32 %v564, %v565
      %v567 = vrot.slane %v566, 1
      %v568 = vadd.f32 %v566, %v567
      %v569 = vrot.slane %v550, 4
      %v570 = vadd.f32 %v550, %v569
      %v571 = vrot.slane %v570, 2
      %v572 = vadd.f32 %v570, %v571
      %v573 = vrot.slane %v572, 1
      %v574 = vadd.f32 %v572, %v573
      %v575 = vrot.slane %v552, 4
      %v576 = vadd.f32 %v552, %v575
      %v577 = vrot.slane %v576, 2
      %v578 = vadd.f32 %v576, %v577
      %v579 = vrot.slane %v578, 1
      %v580 = vadd.f32 %v578, %v579
      %v581 = vrot.slane %v554, 4
      %v582 = vadd.f32 %v554, %v581
      %v583 = vrot.slane %v582, 2
      %v584 = vadd.f32 %v582, %v583
      %v585 = vrot.slane %v584, 1
      %v586 = vadd.f32 %v584, %v585
      %v587 = vrot.slane %v556, 4
      %v588 = vadd.f32 %v556, %v587
      %v589 = vrot.slane %v588, 2
      %v590 = vadd.f32 %v588, %v589
      %v591 = vrot.slane %v590, 1
      %v592 = vadd.f32 %v590, %v591
      %v593 = vrot.slane %v558, 4
      %v594 = vadd.f32 %v558, %v593
      %v595 = vrot.slane %v594, 2
      %v596 = vadd.f32 %v594, %v595
      %v597 = vrot.slane %v596, 1
      %v598 = vadd.f32 %v596, %v597
      %v599 = vrot.slane %v560, 4
      %v600 = vadd.f32 %v560, %v599
      %v601 = vrot.slane %v600, 2
      %v602 = vadd.f32 %v600, %v601
      %v603 = vrot.slane %v602, 1
      %v604 = vadd.f32 %v602, %v603
      %v605 = vrot.slane %v562, 4
      %v606 = vadd.f32 %v562, %v605
      %v607 = vrot.slane %v606, 2
      %v608 = vadd.f32 %v606, %v607
      %v609 = vrot.slane %v608, 1
      %v610 = vadd.f32 %v608, %v609
      %v611 = vrcp.pop %v568
      %v612 = vrcp.pop %v574
      %v613 = vrcp.pop %v580
      %v614 = vrcp.pop %v586
      %v615 = vrcp.pop %v592
      %v616 = vrcp.pop %v598
      %v617 = vrcp.pop %v604
      %v618 = vrcp.pop %v610
      %v623 = vcombine.high %v487, %v487
      %v624 = vcombine.high %v488, %v488
      %v625 = vcombine.high %v489, %v489
      %v626 = vcombine.high %v490, %v490
      %vm631 = vcmask 1042432
      %v632 = vsel %vm631, %v487, -inf
      %v633 = vrot.slane %v632, 4
      %v634 = vmax.f32 %v632, %v633
      %v635 = vrot.slane %v634, 2
      %v636 = vmax.f32 %v634, %v635
      %v637 = vrot.slane %v636, 1
      %v638 = vmax.f32 %v636, %v637
      %v639 = vsel %vm631, %v623, -inf
      %v640 = vrot.slane %v639, 4
      %v641 = vmax.f32 %v639, %v640
      %v642 = vrot.slane %v641, 2
      %v643 = vmax.f32 %v641, %v642
      %v644 = vrot.slane %v643, 1
      %v645 = vmax.f32 %v643, %v644
      %v646 = vsel %vm631, %v488, -inf
      %v647 = vrot.slane %v646, 4
      %v648 = vmax.f32 %v646, %v647
      %v649 = vrot.slane %v648, 2
      %v650 = vmax.f32 %v648, %v649
      %v651 = vrot.slane %v650, 1
      %v652 = vmax.f32 %v650, %v651
      %v653 = vsel %vm631, %v624, -inf
      %v654 = vrot.slane %v653, 4
      %v655 = vmax.f32 %v653, %v654
      %v656 = vrot.slane %v655, 2
      %v657 = vmax.f32 %v655, %v656
      %v658 = vrot.slane %v657, 1
      %v659 = vmax.f32 %v657, %v658
      %v660 = vsel %vm631, %v489, -inf
      %v661 = vrot.slane %v660, 4
      %v662 = vmax.f32 %v660, %v661
      %v663 = vrot.slane %v662, 2
      %v664 = vmax.f32 %v662, %v663
      %v665 = vrot.slane %v664, 1
      %v666 = vmax.f32 %v664, %v665
      %v667 = vsel %vm631, %v625, -inf
      %v668 = vrot.slane %v667, 4
      %v669 = vmax.f32 %v667, %v668
      %v670 = vrot.slane %v669, 2
      %v671 = vmax.f32 %v669, %v670
      %v672 = vrot.slane %v671, 1
      %v673 = vmax.f32 %v671, %v672
      %v674 = vsel %vm631, %v490, -inf
      %v675 = vrot.slane %v674, 4
      %v676 = vmax.f32 %v674, %v675
      %v677 = vrot.slane %v676, 2
      %v678 = vmax.f32 %v676, %v677
      %v679 = vrot.slane %v678, 1
      %v680 = vmax.f32 %v678, %v679
      %v681 = vsel %vm631, %v626, -inf
      %v682 = vrot.slane %v681, 4
      %v683 = vmax.f32 %v681, %v682
      %v684 = vrot.slane %v683, 2
      %v685 = vmax.f32 %v683, %v684
      %v686 = vrot.slane %v685, 1
      %v687 = vmax.f32 %v685, %v686
      %vm688 = vcmp.gt.f32.partialorder %v638, 0.0
      %vm689 = vcmp.gt.f32.partialorder %v645, 0.0
      %vm690 = vcmp.gt.f32.partialorder %v652, 0.0
      %vm691 = vcmp.gt.f32.partialorder %v659, 0.0
      %vm692 = vcmp.gt.f32.partialorder %v666, 0.0
      %vm693 = vcmp.gt.f32.partialorder %v673, 0.0
      %vm694 = vcmp.gt.f32.partialorder %v680, 0.0
      %vm695 = vcmp.gt.f32.partialorder %v687, 0.0
      %v696 = vsel %vm688, %v611, 0.0
      %v697 = vsel %vm689, %v612, 0.0
      %v698 = vsel %vm690, %v613, 0.0
      %v699 = vsel %vm691, %v614, 0.0
      %v700 = vsel %vm692, %v615, 0.0
      %v701 = vsel %vm693, %v616, 0.0
      %v702 = vsel %vm694, %v617, 0.0
      %v703 = vsel %vm695, %v618, 0.0
      %v704 = vmul.f32 %v548, %v696
      %v705 = vmul.f32 %v550, %v697
      %v706 = vmul.f32 %v552, %v698
      %v707 = vmul.f32 %v554, %v699
      %v708 = vmul.f32 %v556, %v700
      %v709 = vmul.f32 %v558, %v701
      %v710 = vmul.f32 %v560, %v702
      %v711 = vmul.f32 %v562, %v703
      %v712 = vpack.c.bf16 %v704, %v704
      %v713 = vpack.c.bf16 %v705, %v705
      %v714 = vpack.c.bf16 %v706, %v706
      %v715 = vpack.c.bf16 %v707, %v707
      %v716 = vpack.c.bf16 %v708, %v708
      %v717 = vpack.c.bf16 %v709, %v709
      %v718 = vpack.c.bf16 %v710, %v710
      %v719 = vpack.c.bf16 %v711, %v711
      %v720 = vpack.c.bf16 %v487, %v487
      %v721 = vpack.c.bf16 %v623, %v623
      %v722 = vpack.c.bf16 %v488, %v488
      %v723 = vpack.c.bf16 %v624, %v624
      %v724 = vpack.c.bf16 %v489, %v489
      %v725 = vpack.c.bf16 %v625, %v625
      %v726 = vpack.c.bf16 %v490, %v490
      %v727 = vpack.c.bf16 %v626, %v626
      %vm728 = vcmask 1041408
      %vm729 = vsmask.f32 1280
      %vm730 = vmand %vm728, %vm729
      %v731 = vsel %vm730, %v720, 1065369472
      %v732 = vsel %vm730, %v721, 1065369472
      %v733 = vsel %vm730, %v722, 1065369472
      %v734 = vsel %vm730, %v723, 1065369472
      %v735 = vsel %vm730, %v724, 1065369472
      %v736 = vsel %vm730, %v725, 1065369472
      %v737 = vsel %vm730, %v726, 1065369472
      %v738 = vsel %vm730, %v727, 1065369472
      %v739 = vld [vmem:[#allocation3] sm:$0xff]
      %740 = vmatprep.subr.bf16.mxu0 %v732
      %741 = vmatpush1.bf16.xpose.msra.mxu0 %v731
      %742 = vmatprep.subr.bf16.mxu0 0
      %743 = vmatpush1.bf16.xpose.msra.mxu0 0
      %744 = vmatprep.subr.bf16.mxu0 0
      %745 = vmatpush1.bf16.xpose.msra.mxu0 0
      %746 = vmatprep.subr.bf16.mxu0 0
      %747 = vmatpush1.bf16.xpose.msra.mxu0 0
      %748 = vmatprep.subr.bf16.mxu0 0
      %749 = vmatpush1.bf16.xpose.msra.mxu0 0
      %750 = vmatprep.subr.bf16.mxu0 0
      %751 = vmatpush1.bf16.xpose.msra.mxu0 0
      %752 = vmatprep.subr.bf16.mxu0 0
      %753 = vmatpush1.bf16.xpose.msra.mxu0 0
      %754 = vmatprep.subr.bf16.mxu0 0
      %755 = vmatpush1.bf16.xpose.msra.mxu0 0
      %756 = vmatprep.subr.bf16.mxu0 0
      %757 = vmatpush1.bf16.xpose.msra.mxu0 0
      %758 = vmatprep.subr.bf16.mxu0 0
      %759 = vmatpush1.bf16.xpose.msra.mxu0 0
      %760 = vmatprep.subr.bf16.mxu0 0
      %761 = vmatpush1.bf16.xpose.msra.mxu0 0
      %762 = vmatprep.subr.bf16.mxu0 0
      %763 = vmatpush1.bf16.xpose.msra.mxu0 0
      %764 = vmatprep.subr.bf16.mxu0 0
      %765 = vmatpush1.bf16.xpose.msra.mxu0 0
      %766 = vmatprep.subr.bf16.mxu0 0
      %767 = vmatpush1.bf16.xpose.msra.mxu0 0
      %768 = vmatprep.subr.bf16.mxu0 0
      %769 = vmatpush1.bf16.xpose.msra.mxu0 0
      %770 = vmatprep.subr.bf16.mxu0 0
      %771 = vmatpush1.bf16.xpose.msra.mxu0 0
      %772 = vmatprep.mubr.bf16.mxu0 %v713
      %773 = vmatmul.mubr.bf16.gmra.mrb[0].mxu0 %v712
      %v774 = vpop.f32.mrb[0].mxu0
      %v775 = vadd.f32 0.0, %v774
      %v776 = vpop.f32.mrb[0].mxu0
      %v777 = vpop.f32.mrb[0].mxu0
      %v778 = vpop.f32.mrb[0].mxu0
      %779 = vdwg.mxu0
      %780 = vmatprep.subr.bf16.mxu0 %v734
      %781 = vmatpush1.bf16.xpose.msra.mxu0 %v733
      %782 = vmatprep.subr.bf16.mxu0 0
      %783 = vmatpush1.bf16.xpose.msra.mxu0 0
      %784 = vmatprep.subr.bf16.mxu0 0
      %785 = vmatpush1.bf16.xpose.msra.mxu0 0
      %786 = vmatprep.subr.bf16.mxu0 0
      %787 = vmatpush1.bf16.xpose.msra.mxu0 0
      %788 = vmatprep.subr.bf16.mxu0 0
      %789 = vmatpush1.bf16.xpose.msra.mxu0 0
      %790 = vmatprep.subr.bf16.mxu0 0
      %791 = vmatpush1.bf16.xpose.msra.mxu0 0
      %792 = vmatprep.subr.bf16.mxu0 0
      %793 = vmatpush1.bf16.xpose.msra.mxu0 0
      %794 = vmatprep.subr.bf16.mxu0 0
      %795 = vmatpush1.bf16.xpose.msra.mxu0 0
      %796 = vmatprep.subr.bf16.mxu0 0
      %797 = vmatpush1.bf16.xpose.msra.mxu0 0
      %798 = vmatprep.subr.bf16.mxu0 0
      %799 = vmatpush1.bf16.xpose.msra.mxu0 0
      %800 = vmatprep.subr.bf16.mxu0 0
      %801 = vmatpush1.bf16.xpose.msra.mxu0 0
      %802 = vmatprep.subr.bf16.mxu0 0
      %803 = vmatpush1.bf16.xpose.msra.mxu0 0
      %804 = vmatprep.subr.bf16.mxu0 0
      %805 = vmatpush1.bf16.xpose.msra.mxu0 0
      %806 = vmatprep.subr.bf16.mxu0 0
      %807 = vmatpush1.bf16.xpose.msra.mxu0 0
      %808 = vmatprep.subr.bf16.mxu0 0
      %809 = vmatpush1.bf16.xpose.msra.mxu0 0
      %810 = vmatprep.subr.bf16.mxu0 0
      %811 = vmatpush1.bf16.xpose.msra.mxu0 0
      %812 = vmatprep.mubr.bf16.mxu0 %v715
      %813 = vmatmul.mubr.bf16.gmra.mrb[0].mxu0 %v714
      %v814 = vpop.f32.mrb[0].mxu0
      %v815 = vadd.f32 %v775, %v814
      %v816 = vpop.f32.mrb[0].mxu0
      %v817 = vpop.f32.mrb[0].mxu0
      %v818 = vpop.f32.mrb[0].mxu0
      %819 = vdwg.mxu0
      %820 = vmatprep.subr.bf16.mxu0 %v736
      %821 = vmatpush1.bf16.xpose.msra.mxu0 %v735
      %822 = vmatprep.subr.bf16.mxu0 0
      %823 = vmatpush1.bf16.xpose.msra.mxu0 0
      %824 = vmatprep.subr.bf16.mxu0 0
      %825 = vmatpush1.bf16.xpose.msra.mxu0 0
      %826 = vmatprep.subr.bf16.mxu0 0
      %827 = vmatpush1.bf16.xpose.msra.mxu0 0
      %828 = vmatprep.subr.bf16.mxu0 0
      %829 = vmatpush1.bf16.xpose.msra.mxu0 0
      %830 = vmatprep.subr.bf16.mxu0 0
      %831 = vmatpush1.bf16.xpose.msra.mxu0 0
      %832 = vmatprep.subr.bf16.mxu0 0
      %833 = vmatpush1.bf16.xpose.msra.mxu0 0
      %834 = vmatprep.subr.bf16.mxu0 0
      %835 = vmatpush1.bf16.xpose.msra.mxu0 0
      %836 = vmatprep.subr.bf16.mxu0 0
      %837 = vmatpush1.bf16.xpose.msra.mxu0 0
      %838 = vmatprep.subr.bf16.mxu0 0
      %839 = vmatpush1.bf16.xpose.msra.mxu0 0
      %840 = vmatprep.subr.bf16.mxu0 0
      %841 = vmatpush1.bf16.xpose.msra.mxu0 0
      %842 = vmatprep.subr.bf16.mxu0 0
      %843 = vmatpush1.bf16.xpose.msra.mxu0 0
      %844 = vmatprep.subr.bf16.mxu0 0
      %845 = vmatpush1.bf16.xpose.msra.mxu0 0
      %846 = vmatprep.subr.bf16.mxu0 0
      %847 = vmatpush1.bf16.xpose.msra.mxu0 0
      %848 = vmatprep.subr.bf16.mxu0 0
      %849 = vmatpush1.bf16.xpose.msra.mxu0 0
      %850 = vmatprep.subr.bf16.mxu0 0
      %851 = vmatpush1.bf16.xpose.msra.mxu0 0
      %852 = vmatprep.mubr.bf16.mxu0 %v717
      %853 = vmatmul.mubr.bf16.gmra.mrb[0].mxu0 %v716
      %v854 = vpop.f32.mrb[0].mxu0
      %v855 = vadd.f32 %v815, %v854
      %v856 = vpop.f32.mrb[0].mxu0
      %v857 = vpop.f32.mrb[0].mxu0
      %v858 = vpop.f32.mrb[0].mxu0
      %859 = vdwg.mxu0
      %860 = vmatprep.subr.bf16.mxu0 %v738
      %861 = vmatpush1.bf16.xpose.msra.mxu0 %v737
      %862 = vmatprep.subr.bf16.mxu0 0
      %863 = vmatpush1.bf16.xpose.msra.mxu0 0
      %864 = vmatprep.subr.bf16.mxu0 0
      %865 = vmatpush1.bf16.xpose.msra.mxu0 0
      %866 = vmatprep.subr.bf16.mxu0 0
      %867 = vmatpush1.bf16.xpose.msra.mxu0 0
      %868 = vmatprep.subr.bf16.mxu0 0
      %869 = vmatpush1.bf16.xpose.msra.mxu0 0
      %870 = vmatprep.subr.bf16.mxu0 0
      %871 = vmatpush1.bf16.xpose.msra.mxu0 0
      %872 = vmatprep.subr.bf16.mxu0 0
      %873 = vmatpush1.bf16.xpose.msra.mxu0 0
      %874 = vmatprep.subr.bf16.mxu0 0
      %875 = vmatpush1.bf16.xpose.msra.mxu0 0
      %876 = vmatprep.subr.bf16.mxu0 0
      %877 = vmatpush1.bf16.xpose.msra.mxu0 0
      %878 = vmatprep.subr.bf16.mxu0 0
      %879 = vmatpush1.bf16.xpose.msra.mxu0 0
      %880 = vmatprep.subr.bf16.mxu0 0
      %881 = vmatpush1.bf16.xpose.msra.mxu0 0
      %882 = vmatprep.subr.bf16.mxu0 0
      %883 = vmatpush1.bf16.xpose.msra.mxu0 0
      %884 = vmatprep.subr.bf16.mxu0 0
      %885 = vmatpush1.bf16.xpose.msra.mxu0 0
      %886 = vmatprep.subr.bf16.mxu0 0
      %887 = vmatpush1.bf16.xpose.msra.mxu0 0
      %888 = vmatprep.subr.bf16.mxu0 0
      %889 = vmatpush1.bf16.xpose.msra.mxu0 0
      %890 = vmatprep.subr.bf16.mxu0 0
      %891 = vmatpush1.bf16.xpose.msra.mxu0 0
      %892 = vmatprep.mubr.bf16.mxu0 %v719
      %893 = vmatmul.mubr.bf16.gmra.mrb[0].mxu0 %v718
      %v894 = vpop.f32.mrb[0].mxu0
      %v895 = vadd.f32 %v855, %v894
      %v896 = vpop.f32.mrb[0].mxu0
      %v897 = vpop.f32.mrb[0].mxu0
      %v898 = vpop.f32.mrb[0].mxu0
      %899 = vdwg.mxu0
      %v900 = vadd.f32 %v739, %v895
      %vm901 = vcmask 31744
      %902 = vst.msk [vmem:[#allocation3] sm:$0xff] %vm901, %v900
      %v903 = vld [vmem:[#allocation4] sm:$0x1]
      %904 = vmatprep.subr.bf16.mxu0 %v721
      %905 = vmatpush1.bf16.xpose.msra.mxu0 %v720
      %906 = vmatprep.subr.bf16.mxu0 0
      %907 = vmatpush1.bf16.xpose.msra.mxu0 0
      %908 = vmatprep.subr.bf16.mxu0 0
      %909 = vmatpush1.bf16.xpose.msra.mxu0 0
      %910 = vmatprep.subr.bf16.mxu0 0
      %911 = vmatpush1.bf16.xpose.msra.mxu0 0
      %912 = vmatprep.subr.bf16.mxu0 0
      %913 = vmatpush1.bf16.xpose.msra.mxu0 0
      %914 = vmatprep.subr.bf16.mxu0 0
      %915 = vmatpush1.bf16.xpose.msra.mxu0 0
      %916 = vmatprep.subr.bf16.mxu0 0
      %917 = vmatpush1.bf16.xpose.msra.mxu0 0
      %918 = vmatprep.subr.bf16.mxu0 0
      %919 = vmatpush1.bf16.xpose.msra.mxu0 0
      %920 = vmatprep.subr.bf16.mxu0 0
      %921 = vmatpush1.bf16.xpose.msra.mxu0 0
      %922 = vmatprep.subr.bf16.mxu0 0
      %923 = vmatpush1.bf16.xpose.msra.mxu0 0
      %924 = vmatprep.subr.bf16.mxu0 0
      %925 = vmatpush1.bf16.xpose.msra.mxu0 0
      %926 = vmatprep.subr.bf16.mxu0 0
      %927 = vmatpush1.bf16.xpose.msra.mxu0 0
      %928 = vmatprep.subr.bf16.mxu0 0
      %929 = vmatpush1.bf16.xpose.msra.mxu0 0
      %930 = vmatprep.subr.bf16.mxu0 0
      %931 = vmatpush1.bf16.xpose.msra.mxu0 0
      %932 = vmatprep.subr.bf16.mxu0 0
      %933 = vmatpush1.bf16.xpose.msra.mxu0 0
      %934 = vmatprep.subr.bf16.mxu0 0
      %935 = vmatpush1.bf16.xpose.msra.mxu0 0
      %936 = vmatprep.mubr.bf16.mxu0 1065369472
      %937 = vmatmul.mubr.bf16.gmra.mrb[0].mxu0 1065369472
      %v938 = vpop.f32.mrb[0].mxu0
      %v939 = vadd.f32 0.0, %v938
      %v940 = vpop.f32.mrb[0].mxu0
      %v941 = vpop.f32.mrb[0].mxu0
      %v942 = vpop.f32.mrb[0].mxu0
      %943 = vdwg.mxu0
      %944 = vmatprep.subr.bf16.mxu0 %v723
      %945 = vmatpush1.bf16.xpose.msra.mxu0 %v722
      %946 = vmatprep.subr.bf16.mxu0 0
      %947 = vmatpush1.bf16.xpose.msra.mxu0 0
      %948 = vmatprep.subr.bf16.mxu0 0
      %949 = vmatpush1.bf16.xpose.msra.mxu0 0
      %950 = vmatprep.subr.bf16.mxu0 0
      %951 = vmatpush1.bf16.xpose.msra.mxu0 0
      %952 = vmatprep.subr.bf16.mxu0 0
      %953 = vmatpush1.bf16.xpose.msra.mxu0 0
      %954 = vmatprep.subr.bf16.mxu0 0
      %955 = vmatpush1.bf16.xpose.msra.mxu0 0
      %956 = vmatprep.subr.bf16.mxu0 0
      %957 = vmatpush1.bf16.xpose.msra.mxu0 0
      %958 = vmatprep.subr.bf16.mxu0 0
      %959 = vmatpush1.bf16.xpose.msra.mxu0 0
      %960 = vmatprep.subr.bf16.mxu0 0
      %961 = vmatpush1.bf16.xpose.msra.mxu0 0
      %962 = vmatprep.subr.bf16.mxu0 0
      %963 = vmatpush1.bf16.xpose.msra.mxu0 0
      %964 = vmatprep.subr.bf16.mxu0 0
      %965 = vmatpush1.bf16.xpose.msra.mxu0 0
      %966 = vmatprep.subr.bf16.mxu0 0
      %967 = vmatpush1.bf16.xpose.msra.mxu0 0
      %968 = vmatprep.subr.bf16.mxu0 0
      %969 = vmatpush1.bf16.xpose.msra.mxu0 0
      %970 = vmatprep.subr.bf16.mxu0 0
      %971 = vmatpush1.bf16.xpose.msra.mxu0 0
      %972 = vmatprep.subr.bf16.mxu0 0
      %973 = vmatpush1.bf16.xpose.msra.mxu0 0
      %974 = vmatprep.subr.bf16.mxu0 0
      %975 = vmatpush1.bf16.xpose.msra.mxu0 0
      %976 = vmatprep.mubr.bf16.mxu0 1065369472
      %977 = vmatmul.mubr.bf16.gmra.mrb[0].mxu0 1065369472
      %v978 = vpop.f32.mrb[0].mxu0
      %v979 = vadd.f32 %v939, %v978
      %v980 = vpop.f32.mrb[0].mxu0
      %v981 = vpop.f32.mrb[0].mxu0
      %v982 = vpop.f32.mrb[0].mxu0
      %983 = vdwg.mxu0
      %984 = vmatprep.subr.bf16.mxu0 %v725
      %985 = vmatpush1.bf16.xpose.msra.mxu0 %v724
      %986 = vmatprep.subr.bf16.mxu0 0
      %987 = vmatpush1.bf16.xpose.msra.mxu0 0
      %988 = vmatprep.subr.bf16.mxu0 0
      %989 = vmatpush1.bf16.xpose.msra.mxu0 0
      %990 = vmatprep.subr.bf16.mxu0 0
      %991 = vmatpush1.bf16.xpose.msra.mxu0 0
      %992 = vmatprep.subr.bf16.mxu0 0
      %993 = vmatpush1.bf16.xpose.msra.mxu0 0
      %994 = vmatprep.subr.bf16.mxu0 0
      %995 = vmatpush1.bf16.xpose.msra.mxu0 0
      %996 = vmatprep.subr.bf16.mxu0 0
      %997 = vmatpush1.bf16.xpose.msra.mxu0 0
      %998 = vmatprep.subr.bf16.mxu0 0
      %999 = vmatpush1.bf16.xpose.msra.mxu0 0
      %1000 = vmatprep.subr.bf16.mxu0 0
      %1001 = vmatpush1.bf16.xpose.msra.mxu0 0
      %1002 = vmatprep.subr.bf16.mxu0 0
      %1003 = vmatpush1.bf16.xpose.msra.mxu0 0
      %1004 = vmatprep.subr.bf16.mxu0 0
      %1005 = vmatpush1.bf16.xpose.msra.mxu0 0
      %1006 = vmatprep.subr.bf16.mxu0 0
      %1007 = vmatpush1.bf16.xpose.msra.mxu0 0
      %1008 = vmatprep.subr.bf16.mxu0 0
      %1009 = vmatpush1.bf16.xpose.msra.mxu0 0
      %1010 = vmatprep.subr.bf16.mxu0 0
      %1011 = vmatpush1.bf16.xpose.msra.mxu0 0
      %1012 = vmatprep.subr.bf16.mxu0 0
      %1013 = vmatpush1.bf16.xpose.msra.mxu0 0
      %1014 = vmatprep.subr.bf16.mxu0 0
      %1015 = vmatpush1.bf16.xpose.msra.mxu0 0
      %1016 = vmatprep.mubr.bf16.mxu0 1065369472
      %1017 = vmatmul.mubr.bf16.gmra.mrb[0].mxu0 1065369472
      %v1018 = vpop.f32.mrb[0].mxu0
      %v1019 = vadd.f32 %v979, %v1018
      %v1020 = vpop.f32.mrb[0].mxu0
      %v1021 = vpop.f32.mrb[0].mxu0
      %v1022 = vpop.f32.mrb[0].mxu0
      %1023 = vdwg.mxu0
      %1024 = vmatprep.subr.bf16.mxu0 %v727
      %1025 = vmatpush1.bf16.xpose.msra.mxu0 %v726
      %1026 = vmatprep.subr.bf16.mxu0 0
      %1027 = vmatpush1.bf16.xpose.msra.mxu0 0
      %1028 = vmatprep.subr.bf16.mxu0 0
      %1029 = vmatpush1.bf16.xpose.msra.mxu0 0
      %1030 = vmatprep.subr.bf16.mxu0 0
      %1031 = vmatpush1.bf16.xpose.msra.mxu0 0
      %1032 = vmatprep.subr.bf16.mxu0 0
      %1033 = vmatpush1.bf16.xpose.msra.mxu0 0
      %1034 = vmatprep.subr.bf16.mxu0 0
      %1035 = vmatpush1.bf16.xpose.msra.mxu0 0
      %1036 = vmatprep.subr.bf16.mxu0 0
      %1037 = vmatpush1.bf16.xpose.msra.mxu0 0
      %1038 = vmatprep.subr.bf16.mxu0 0
      %1039 = vmatpush1.bf16.xpose.msra.mxu0 0
      %1040 = vmatprep.subr.bf16.mxu0 0
      %1041 = vmatpush1.bf16.xpose.msra.mxu0 0
      %1042 = vmatprep.subr.bf16.mxu0 0
      %1043 = vmatpush1.bf16.xpose.msra.mxu0 0
      %1044 = vmatprep.subr.bf16.mxu0 0
      %1045 = vmatpush1.bf16.xpose.msra.mxu0 0
      %1046 = vmatprep.subr.bf16.mxu0 0
      %1047 = vmatpush1.bf16.xpose.msra.mxu0 0
      %1048 = vmatprep.subr.bf16.mxu0 0
      %1049 = vmatpush1.bf16.xpose.msra.mxu0 0
      %1050 = vmatprep.subr.bf16.mxu0 0
      %1051 = vmatpush1.bf16.xpose.msra.mxu0 0
      %1052 = vmatprep.subr.bf16.mxu0 0
      %1053 = vmatpush1.bf16.xpose.msra.mxu0 0
      %1054 = vmatprep.subr.bf16.mxu0 0
      %1055 = vmatpush1.bf16.xpose.msra.mxu0 0
      %1056 = vmatprep.mubr.bf16.mxu0 1065369472
      %1057 = vmatmul.mubr.bf16.gmra.mrb[0].mxu0 1065369472
      %v1058 = vpop.f32.mrb[0].mxu0
      %v1059 = vadd.f32 %v1019, %v1058
      %v1060 = vpop.f32.mrb[0].mxu0
      %v1061 = vpop.f32.mrb[0].mxu0
      %v1062 = vpop.f32.mrb[0].mxu0
      %1063 = vdwg.mxu0
      %v1064 = vadd.f32 %v903, %v1059
      %vm1065 = vcmask 16384
      %1066 = vst.msk [vmem:[#allocation4] sm:$0x1] %vm1065, %v1064
      // Predicated region
      $region41: #{tpu_custom_call.1} parent=35 // pred_check
        %p1067 = pneg %p368
      $region42: #{tpu_custom_call.1} parent=35 // pred_check_branch
        %1069 = sbr.rel (%p1067) target = $region44
      $region43: #{tpu_custom_call.1} parent=35 // pred_region
        %v1070 = vld [vmem:[#allocation3] sm:$0xff]
        %v1071 = vld [vmem:[#allocation4] sm:$0x1]
        %1073 = vset.pattern.permute.xlu0 3
        %1074 = vperm.xlu0 %1073, %v1070
        %v1075 = vpop.permute.xlu0 %1074
        %v1078 = vlaneseq
        %v1079 = vshrl.u32 %v1078, 7
        %v1080 = vsub.s32 0, %v1079
        %v1081 = vrot.slane %v1071, %v1080
        %v1083 = vadd.f32 %v1075, %v1081
        %v1084 = vmul.f32 %v1083, 0.5
        %v1085 = vadd.f32 %v1084, 1e-05
        %v1086 = vrcp.pop %v1085
        %v1087 = vmul.f32 %v1070, %v1086
        %v1088 = vld [vmem:[#allocation2] sm:$0xff]
        %vm1089 = vcmask 23552
        %1090 = vst.msk [vmem:[%s357] sm:$0xff] %vm1089, %v1088
        %1091 = vst.msk [vmem:[%s361] sm:$0xff] %vm1089, %v1087
        %v1092 = vsub.f32 0.0, %v1087
        %v1093 = vmul.f32 %v1092, %v1088
        %1094 = vst.msk [vmem:[%s365] sm:$0xff] %vm1089, %v1093
      $region44: #{tpu_custom_call.1} parent=35 // pred_fallthru
        _
      %p1095 = scmp.lt.s32.totalorder %s22, 1
      %s1096 = scalar_select %p1095, %s22, 1
      %s1097 = smul.addr %s1096, 8
      %s1098 = scalar_lea.vmem %s4, %s1097
      %p1099 = scmp.lt.s32.totalorder %s22, 1
      %s1100 = scalar_select %p1099, %s22, 1
      %s1101 = smul.addr %s1100, 8
      %s1102 = scalar_lea.vmem %s5, %s1101
      %p1103 = scmp.lt.s32.totalorder %s22, 1
      %s1104 = scalar_select %p1103, %s22, 1
      %s1105 = smul.addr %s1104, 8
      %s1106 = scalar_lea.vmem %s6, %s1105
      // Predicated region
      $region45: #{tpu_custom_call.1} parent=35 // pred_check
        %p1107 = pneg %p156
      $region46: #{tpu_custom_call.1} parent=35 // pred_check_branch
        %1109 = sbr.rel (%p1107) target = $region48
      $region47: #{tpu_custom_call.1} parent=35 // pred_region
        _
      $region48: #{tpu_custom_call.1} parent=35 // pred_fallthru
        _
      // Predicated region
      $region49: #{tpu_custom_call.1} parent=35 // pred_check
        %p1110 = pneg %p182
      $region50: #{tpu_custom_call.1} parent=35 // pred_check_branch
        %1112 = sbr.rel (%p1110) target = $region52
      $region51: #{tpu_custom_call.1} parent=35 // pred_region
        _
      $region52: #{tpu_custom_call.1} parent=35 // pred_fallthru
        _
      // Predicated region
      $region53: #{tpu_custom_call.1} parent=35 // pred_check
        %p1113 = pneg %p208
      $region54: #{tpu_custom_call.1} parent=35 // pred_check_branch
        %1115 = sbr.rel (%p1113) target = $region56
      $region55: #{tpu_custom_call.1} parent=35 // pred_region
        _
      $region56: #{tpu_custom_call.1} parent=35 // pred_fallthru
        _
    $region36: #{tpu_custom_call.1} parent=5 // pred_fallthru
      _
    %p1116 = scmp.le.s32.totalorder 2, %s13
    // Predicated region
    $region57: #{tpu_custom_call.1} parent=5 // pred_check
      %p1117 = pneg %p1116
    $region58: #{tpu_custom_call.1} parent=5 // pred_check_branch
      %1119 = sbr.rel (%p1117) target = $region60
    $region59: #{tpu_custom_call.1} parent=5 // pred_region
      %s1120 = ssub.s32 %s13, 2
      // Predicated region
      $region61: #{tpu_custom_call.1} parent=59 // pred_check
        %p1121 = pneg %p162
      $region62: #{tpu_custom_call.1} parent=59 // pred_check_branch
        %1123 = sbr.rel (%p1121) target = $region64
      $region63: #{tpu_custom_call.1} parent=59 // pred_region
        %p1124 = scmp.lt.s32.totalorder %s24, 1
        %s1125 = scalar_select %p1124, %s24, 1
        %s1126 = smul.addr %s1125, 8
        %s1127 = scalar_lea.vmem %s4, %s1126
      $region64: #{tpu_custom_call.1} parent=59 // pred_fallthru
        _
      // Predicated region
      $region65: #{tpu_custom_call.1} parent=59 // pred_check
        %p1128 = pneg %p188
      $region66: #{tpu_custom_call.1} parent=59 // pred_check_branch
        %1130 = sbr.rel (%p1128) target = $region68
      $region67: #{tpu_custom_call.1} parent=59 // pred_region
        %p1131 = scmp.lt.s32.totalorder %s24, 1
        %s1132 = scalar_select %p1131, %s24, 1
        %s1133 = smul.addr %s1132, 8
        %s1134 = scalar_lea.vmem %s5, %s1133
      $region68: #{tpu_custom_call.1} parent=59 // pred_fallthru
        _
      // Predicated region
      $region69: #{tpu_custom_call.1} parent=59 // pred_check
        %p1135 = pneg %p214
      $region70: #{tpu_custom_call.1} parent=59 // pred_check_branch
        %1137 = sbr.rel (%p1135) target = $region72
      $region71: #{tpu_custom_call.1} parent=59 // pred_region
        %p1138 = scmp.lt.s32.totalorder %s24, 1
        %s1139 = scalar_select %p1138, %s24, 1
        %s1140 = smul.addr %s1139, 8
        %s1141 = scalar_lea.vmem %s6, %s1140
      $region72: #{tpu_custom_call.1} parent=59 // pred_fallthru
        _
    $region60: #{tpu_custom_call.1} parent=5 // pred_fallthru
      _
  $region6: #{tpu_custom_call.1} parent=0 // loop_footer
    %s17 = sadd.s32 1, %s13
  $region7: #{tpu_custom_call.1} parent=0 // loop_footer_branch
    %12 = sbr.rel target = $region3
  $region8: #{tpu_custom_call.1} parent=0 // loop_exit
    _

</llo_original>
